<compile_context>
chip_gen: v7x
topology: tpu7x:2x2x1
jax: 0.10.0
libtpu: 0.0.40
codegen_flags: <defaults>
</compile_context>

<pallas_src>
import functools

import jax
import jax.numpy as jnp
from jax import lax
from jax.experimental import pallas as pl
from jax.experimental.pallas import tpu as pltpu


def _vmem_capacity_bytes() -> int:
    try:
        return int(pltpu.get_tpu_info().vmem_capacity_bytes)
    except Exception:  # conservative (v7x-sized) fallback
        return 64 * 1024 * 1024


def _spatial_attention_kernel(x_ref, w_ref, o_ref,
                              sum_acc, max_acc, avg_pad, max_pad, *,
                              C, c_blk, K, H, W, mask_tail):
    P = K // 2
    c_idx = pl.program_id(1)
    nc = pl.num_programs(1)

    # ---- init accumulators on the first channel chunk ----------------------
    @pl.when(c_idx == 0)
    def _init():
        sum_acc[...] = jnp.zeros((H, W), jnp.float32)
        max_acc[...] = jnp.full((H, W), -jnp.inf, jnp.float32)

    # ---- channel-chunk reduction (VPU, plane by plane) ----------------------
    rem = C % c_blk                      # number of valid channels in last chunk
    not_last = c_idx < nc - 1
    chunk_sum = jnp.zeros((H, W), jnp.float32)
    chunk_max = jnp.full((H, W), -jnp.inf, jnp.float32)
    for cc in range(c_blk):              # static unroll; c_blk is small
        v = x_ref[0, cc]                 # (H, W) plane, loaded from VMEM block
        if mask_tail and cc >= rem:
            # channel only exists when this is NOT the (partial) last chunk
            chunk_sum = chunk_sum + jnp.where(not_last, v, 0.0)
            chunk_max = jnp.maximum(chunk_max, jnp.where(not_last, v, -jnp.inf))
        else:
            chunk_sum = chunk_sum + v
            chunk_max = jnp.maximum(chunk_max, v)

    sum_acc[...] = sum_acc[...] + chunk_sum
    max_acc[...] = jnp.maximum(max_acc[...], chunk_max)

    # ---- finalize: zero-pad, 7x7 conv as shifted weighted sum, sigmoid ------
    @pl.when(c_idx == nc - 1)
    def _finalize():
        Hp, Wp = H + 2 * P, W + 2 * P
        avg_pad[...] = jnp.zeros((Hp, Wp), jnp.float32)
        max_pad[...] = jnp.zeros((Hp, Wp), jnp.float32)
        avg_pad[P:P + H, P:P + W] = sum_acc[...] * (1.0 / C)
        max_pad[P:P + H, P:P + W] = max_acc[...]

        acc = jnp.zeros((H, W), jnp.float32)
        for i in range(K):
            for j in range(K):
                acc = acc + (w_ref[0, i * K + j] * avg_pad[i:i + H, j:j + W]
                             + w_ref[1, i * K + j] * max_pad[i:i + H, j:j + W])
        # fused sigmoid epilogue; store with W in the lane dim (lane-dense)
        o_ref[0] = jax.nn.sigmoid(acc)


@functools.partial(jax.jit, static_argnames=("kernel_size", "c_block"))
def spatial_attention(x, weight, kernel_size=7, c_block=None):
    """SpatialAttention forward.

    x      : (B, C, H, W) float32   PyTorch NCHW activation
    weight : (1, 2, K, K) float32   PyTorch Conv2d(2, 1, K, bias=False) weight
    returns: (B, 1, H, W) float32   sigmoid spatial attention map
    """
    assert kernel_size in (3, 7), "kernel size must be 3 or 7"
    B, C, H, W = x.shape
    K = kernel_size
    P = K // 2
    Hp, Wp = H + 2 * P, W + 2 * P

    x = x.astype(jnp.float32)
    w = weight.astype(jnp.float32).reshape(2, K * K)   # row 0: avg, row 1: max

    # Generation-aware channel-chunk size (v7x: 64 MiB VMEM, v5e/v6e: 128 MiB):
    # keep one double-buffered input slab well inside the VMEM budget.
    vmem_cap = _vmem_capacity_bytes()
    budget = max(vmem_cap // 8, 1 << 20)
    plane_bytes = H * W * 4
    c_blk = int(max(1, min(C, 64, budget // (2 * plane_bytes))))
    if c_block is not None:
        c_blk = int(max(1, min(C, c_block)))
    n_c = pl.cdiv(C, c_blk)
    mask_tail = (C % c_blk) != 0

    kernel = functools.partial(
        _spatial_attention_kernel,
        C=C, c_blk=c_blk, K=K, H=H, W=W, mask_tail=mask_tail)

    out = pl.pallas_call(
        kernel,
        out_shape=jax.ShapeDtypeStruct((B, H, W), jnp.float32),
        grid=(B, n_c),
        in_specs=[
            # activation: one (c_blk, H, W) slab per grid step, read exactly once
            pl.BlockSpec((1, c_blk, H, W), lambda b, c: (b, c, 0, 0)),
            # the 2*K*K conv weights live in SMEM and are used as scalar multipliers
            pl.BlockSpec(memory_space=pltpu.MemorySpace.SMEM),
        ],
        out_specs=pl.BlockSpec((1, H, W), lambda b, c: (b, 0, 0)),
        scratch_shapes=[
            pltpu.VMEM((H, W), jnp.float32),     # running channel sum
            pltpu.VMEM((H, W), jnp.float32),     # running channel max
            pltpu.VMEM((Hp, Wp), jnp.float32),   # zero-padded avg plane
            pltpu.VMEM((Hp, Wp), jnp.float32),   # zero-padded max plane
        ],
        compiler_params=pltpu.CompilerParams(
            dimension_semantics=("parallel", "arbitrary"),
            vmem_limit_bytes=int(min(vmem_cap // 2, 100 * 1024 * 1024)),
        ),
    )(x, w)
    return out.reshape(B, 1, H, W)


if __name__ == "__main__":
    key = jax.random.PRNGKey(0)
    kx, kw = jax.random.split(key)
    B, C, H, W = 2, 4, 16, 16
    K = 7
    x = jax.random.normal(kx, (B, C, H, W), dtype=jnp.float32)
    weight = jax.random.normal(kw, (1, 2, K, K), dtype=jnp.float32) * (2.0 * K * K) ** -0.5

    # Pallas kernel: single-chunk fast path and the multi-chunk accumulation path.
    out = spatial_attention(x, weight, kernel_size=K)
    out_chunked = spatial_attention(x, weight, kernel_size=K, c_block=3)
    jax.block_until_ready((out, out_chunked))
    assert out.shape == (B, 1, H, W), out.shape

    # Pure-JAX reference (same math, XLA lowering).
    avg = jnp.mean(x, axis=1, keepdims=True)
    mx = jnp.max(x, axis=1, keepdims=True)
    cat = jnp.concatenate([avg, mx], axis=1)
    ref = jax.nn.sigmoid(lax.conv_general_dilated(
        cat, weight, window_strides=(1, 1),
        padding=[(K // 2, K // 2), (K // 2, K // 2)],
        dimension_numbers=("NCHW", "OIHW", "NCHW")))

    assert bool(jnp.all(jnp.isfinite(out)))
    err = float(jnp.max(jnp.abs(out - ref)))
    err_chunked = float(jnp.max(jnp.abs(out_chunked - ref)))
    assert err < 2e-5 and err_chunked < 2e-5, (err, err_chunked)
    print("KERNEL_OK")
</pallas_src>

<mosaic_0001>
module attributes {stable_mosaic.version = 11 : i64} {
  func.func @_spatial_attention_kernel(%arg0: i32, %arg1: i32, %arg2: memref<1x4x16x16xf32, #tpu.memory_space<vmem>>, %arg3: memref<2x49xf32, #tpu.memory_space<smem>>, %arg4: memref<1x16x16xf32, #tpu.memory_space<vmem>>, %arg5: memref<16x16xf32, #tpu.memory_space<vmem>>, %arg6: memref<16x16xf32, #tpu.memory_space<vmem>>, %arg7: memref<22x22xf32, #tpu.memory_space<vmem>>, %arg8: memref<22x22xf32, #tpu.memory_space<vmem>>) attributes {dimension_semantics = [#tpu.dimension_semantics<parallel>, #tpu.dimension_semantics<arbitrary>], iteration_bounds = array<i64: 2, 1>, scalar_prefetch = 0 : i64, scratch_operands = 4 : i64, tpu.core_type = #tpu.core_type<tc>, window_params = [{transform_indices = @transform_0, window_bounds = array<i64: 1, 4, 16, 16>}, {transform_indices = @transform_1, window_bounds = array<i64: 2, 49>}, {transform_indices = @transform_2, window_bounds = array<i64: 1, 16, 16>}]} {
    %c0_i32 = arith.constant 0 : i32
    %0 = arith.cmpi eq, %arg1, %c0_i32 : i32
    %1 = arith.extui %0 : i1 to i32
    %c0_i32_0 = arith.constant 0 : i32
    %2 = arith.cmpi ne, %1, %c0_i32_0 : i32
    scf.if %2 {
      %cst_24 = arith.constant 0.000000e+00 : f32
      %30 = vector.broadcast %cst_24 : f32 to vector<16x16xf32>
      %c0_25 = arith.constant 0 : index
      %c0_26 = arith.constant 0 : index
      %31 = vector.load %arg5[%c0_25, %c0_26] : memref<16x16xf32, #tpu.memory_space<vmem>>, vector<16x16xf32>
      tpu.vector_store %arg5[%c0_25, %c0_26], %30 {strides = array<i32>} : memref<16x16xf32, #tpu.memory_space<vmem>>, vector<16x16xf32>,
      %cst_27 = arith.constant 0xFF800000 : f32
      %32 = vector.broadcast %cst_27 : f32 to vector<16x16xf32>
      %c0_28 = arith.constant 0 : index
      %c0_29 = arith.constant 0 : index
      %33 = vector.load %arg6[%c0_28, %c0_29] : memref<16x16xf32, #tpu.memory_space<vmem>>, vector<16x16xf32>
      tpu.vector_store %arg6[%c0_28, %c0_29], %32 {strides = array<i32>} : memref<16x16xf32, #tpu.memory_space<vmem>>, vector<16x16xf32>,
    } else {
    }
    %cst = arith.constant 0.000000e+00 : f32
    %3 = vector.broadcast %cst : f32 to vector<16x16xf32>
    %cst_1 = arith.constant 0xFF800000 : f32
    %4 = vector.broadcast %cst_1 : f32 to vector<16x16xf32>
    %c0 = arith.constant 0 : index
    %c0_2 = arith.constant 0 : index
    %c0_3 = arith.constant 0 : index
    %c0_4 = arith.constant 0 : index
    %5 = vector.load %arg2[%c0, %c0_2, %c0_3, %c0_4] : memref<1x4x16x16xf32, #tpu.memory_space<vmem>>, vector<1x1x16x16xf32>
    %6 = vector.shape_cast %5 : vector<1x1x16x16xf32> to vector<16x16xf32>
    %7 = arith.addf %3, %6 : vector<16x16xf32>
    %8 = arith.maximumf %4, %6 : vector<16x16xf32>
    %c0_5 = arith.constant 0 : index
    %c1 = arith.constant 1 : index
    %c0_6 = arith.constant 0 : index
    %c0_7 = arith.constant 0 : index
    %9 = vector.load %arg2[%c0_5, %c1, %c0_6, %c0_7] : memref<1x4x16x16xf32, #tpu.memory_space<vmem>>, vector<1x1x16x16xf32>
    %10 = vector.shape_cast %9 : vector<1x1x16x16xf32> to vector<16x16xf32>
    %11 = arith.addf %7, %10 : vector<16x16xf32>
    %12 = arith.maximumf %8, %10 : vector<16x16xf32>
    %c0_8 = arith.constant 0 : index
    %c2 = arith.constant 2 : index
    %c0_9 = arith.constant 0 : index
    %c0_10 = arith.constant 0 : index
    %13 = vector.load %arg2[%c0_8, %c2, %c0_9, %c0_10] : memref<1x4x16x16xf32, #tpu.memory_space<vmem>>, vector<1x1x16x16xf32>
    %14 = vector.shape_cast %13 : vector<1x1x16x16xf32> to vector<16x16xf32>
    %15 = arith.addf %11, %14 : vector<16x16xf32>
    %16 = arith.maximumf %12, %14 : vector<16x16xf32>
    %c0_11 = arith.constant 0 : index
    %c3 = arith.constant 3 : index
    %c0_12 = arith.constant 0 : index
    %c0_13 = arith.constant 0 : index
    %17 = vector.load %arg2[%c0_11, %c3, %c0_12, %c0_13] : memref<1x4x16x16xf32, #tpu.memory_space<vmem>>, vector<1x1x16x16xf32>
    %18 = vector.shape_cast %17 : vector<1x1x16x16xf32> to vector<16x16xf32>
    %19 = arith.addf %15, %18 : vector<16x16xf32>
    %20 = arith.maximumf %16, %18 : vector<16x16xf32>
    %c0_14 = arith.constant 0 : index
    %c0_15 = arith.constant 0 : index
    %21 = vector.load %arg5[%c0_14, %c0_15] : memref<16x16xf32, #tpu.memory_space<vmem>>, vector<16x16xf32>
    %22 = arith.addf %21, %19 : vector<16x16xf32>
    %c0_16 = arith.constant 0 : index
    %c0_17 = arith.constant 0 : index
    %23 = vector.load %arg5[%c0_16, %c0_17] : memref<16x16xf32, #tpu.memory_space<vmem>>, vector<16x16xf32>
    tpu.vector_store %arg5[%c0_16, %c0_17], %22 {strides = array<i32>} : memref<16x16xf32, #tpu.memory_space<vmem>>, vector<16x16xf32>,
    %c0_18 = arith.constant 0 : index
    %c0_19 = arith.constant 0 : index
    %24 = vector.load %arg6[%c0_18, %c0_19] : memref<16x16xf32, #tpu.memory_space<vmem>>, vector<16x16xf32>
    %25 = arith.maximumf %24, %20 : vector<16x16xf32>
    %c0_20 = arith.constant 0 : index
    %c0_21 = arith.constant 0 : index
    %26 = vector.load %arg6[%c0_20, %c0_21] : memref<16x16xf32, #tpu.memory_space<vmem>>, vector<16x16xf32>
    tpu.vector_store %arg6[%c0_20, %c0_21], %25 {strides = array<i32>} : memref<16x16xf32, #tpu.memory_space<vmem>>, vector<16x16xf32>,
    %c0_i32_22 = arith.constant 0 : i32
    %27 = arith.cmpi eq, %arg1, %c0_i32_22 : i32
    %28 = arith.extui %27 : i1 to i32
    %c0_i32_23 = arith.constant 0 : i32
    %29 = arith.cmpi ne, %28, %c0_i32_23 : i32
    scf.if %29 {
      %cst_24 = arith.constant 0.000000e+00 : f32
      %30 = vector.broadcast %cst_24 : f32 to vector<22x22xf32>
      %c0_25 = arith.constant 0 : index
      %c0_26 = arith.constant 0 : index
      %31 = vector.load %arg7[%c0_25, %c0_26] : memref<22x22xf32, #tpu.memory_space<vmem>>, vector<22x22xf32>
      tpu.vector_store %arg7[%c0_25, %c0_26], %30 {strides = array<i32>} : memref<22x22xf32, #tpu.memory_space<vmem>>, vector<22x22xf32>,
      %cst_27 = arith.constant 0.000000e+00 : f32
      %32 = vector.broadcast %cst_27 : f32 to vector<22x22xf32>
      %c0_28 = arith.constant 0 : index
      %c0_29 = arith.constant 0 : index
      %33 = vector.load %arg8[%c0_28, %c0_29] : memref<22x22xf32, #tpu.memory_space<vmem>>, vector<22x22xf32>
      tpu.vector_store %arg8[%c0_28, %c0_29], %32 {strides = array<i32>} : memref<22x22xf32, #tpu.memory_space<vmem>>, vector<22x22xf32>,
      %c0_30 = arith.constant 0 : index
      %c0_31 = arith.constant 0 : index
      %34 = vector.load %arg5[%c0_30, %c0_31] : memref<16x16xf32, #tpu.memory_space<vmem>>, vector<16x16xf32>
      %cst_32 = arith.constant 2.500000e-01 : f32
      %35 = vector.broadcast %cst_32 : f32 to vector<16x16xf32>
      %36 = arith.mulf %34, %35 : vector<16x16xf32>
      %c3_33 = arith.constant 3 : index
      %c3_34 = arith.constant 3 : index
      %37 = vector.load %arg7[%c3_33, %c3_34] : memref<22x22xf32, #tpu.memory_space<vmem>>, vector<16x16xf32>
      tpu.vector_store %arg7[%c3_33, %c3_34], %36 {strides = array<i32>} : memref<22x22xf32, #tpu.memory_space<vmem>>, vector<16x16xf32>,
      %c0_35 = arith.constant 0 : index
      %c0_36 = arith.constant 0 : index
      %38 = vector.load %arg6[%c0_35, %c0_36] : memref<16x16xf32, #tpu.memory_space<vmem>>, vector<16x16xf32>
      %c3_37 = arith.constant 3 : index
      %c3_38 = arith.constant 3 : index
      %39 = vector.load %arg8[%c3_37, %c3_38] : memref<22x22xf32, #tpu.memory_space<vmem>>, vector<16x16xf32>
      tpu.vector_store %arg8[%c3_37, %c3_38], %38 {strides = array<i32>} : memref<22x22xf32, #tpu.memory_space<vmem>>, vector<16x16xf32>,
      %cst_39 = arith.constant 0.000000e+00 : f32
      %40 = vector.broadcast %cst_39 : f32 to vector<16x16xf32>
      %c0_40 = arith.constant 0 : index
      %c0_41 = arith.constant 0 : index
      %41 = memref.load %arg3[%c0_40, %c0_41] : memref<2x49xf32, #tpu.memory_space<smem>>
      %c0_42 = arith.constant 0 : index
      %c0_43 = arith.constant 0 : index
      %42 = vector.load %arg7[%c0_42, %c0_43] : memref<22x22xf32, #tpu.memory_space<vmem>>, vector<16x16xf32>
      %43 = vector.broadcast %41 : f32 to vector<16x16xf32>
      %44 = arith.mulf %43, %42 : vector<16x16xf32>
      %c1_44 = arith.constant 1 : index
      %c0_45 = arith.constant 0 : index
      %45 = memref.load %arg3[%c1_44, %c0_45] : memref<2x49xf32, #tpu.memory_space<smem>>
      %c0_46 = arith.constant 0 : index
      %c0_47 = arith.constant 0 : index
      %46 = vector.load %arg8[%c0_46, %c0_47] : memref<22x22xf32, #tpu.memory_space<vmem>>, vector<16x16xf32>
      %47 = vector.broadcast %45 : f32 to vector<16x16xf32>
      %48 = arith.mulf %47, %46 : vector<16x16xf32>
      %49 = arith.addf %44, %48 : vector<16x16xf32>
      %50 = arith.addf %40, %49 : vector<16x16xf32>
      %c0_48 = arith.constant 0 : index
      %c1_49 = arith.constant 1 : index
      %51 = memref.load %arg3[%c0_48, %c1_49] : memref<2x49xf32, #tpu.memory_space<smem>>
      %c0_50 = arith.constant 0 : index
      %c1_51 = arith.constant 1 : index
      %52 = vector.load %arg7[%c0_50, %c1_51] : memref<22x22xf32, #tpu.memory_space<vmem>>, vector<16x16xf32>
      %53 = vector.broadcast %51 : f32 to vector<16x16xf32>
      %54 = arith.mulf %53, %52 : vector<16x16xf32>
      %c1_52 = arith.constant 1 : index
      %c1_53 = arith.constant 1 : index
      %55 = memref.load %arg3[%c1_52, %c1_53] : memref<2x49xf32, #tpu.memory_space<smem>>
      %c0_54 = arith.constant 0 : index
      %c1_55 = arith.constant 1 : index
      %56 = vector.load %arg8[%c0_54, %c1_55] : memref<22x22xf32, #tpu.memory_space<vmem>>, vector<16x16xf32>
      %57 = vector.broadcast %55 : f32 to vector<16x16xf32>
      %58 = arith.mulf %57, %56 : vector<16x16xf32>
      %59 = arith.addf %54, %58 : vector<16x16xf32>
      %60 = arith.addf %50, %59 : vector<16x16xf32>
      %c0_56 = arith.constant 0 : index
      %c2_57 = arith.constant 2 : index
      %61 = memref.load %arg3[%c0_56, %c2_57] : memref<2x49xf32, #tpu.memory_space<smem>>
      %c0_58 = arith.constant 0 : index
      %c2_59 = arith.constant 2 : index
      %62 = vector.load %arg7[%c0_58, %c2_59] : memref<22x22xf32, #tpu.memory_space<vmem>>, vector<16x16xf32>
      %63 = vector.broadcast %61 : f32 to vector<16x16xf32>
      %64 = arith.mulf %63, %62 : vector<16x16xf32>
      %c1_60 = arith.constant 1 : index
      %c2_61 = arith.constant 2 : index
      %65 = memref.load %arg3[%c1_60, %c2_61] : memref<2x49xf32, #tpu.memory_space<smem>>
      %c0_62 = arith.constant 0 : index
      %c2_63 = arith.constant 2 : index
      %66 = vector.load %arg8[%c0_62, %c2_63] : memref<22x22xf32, #tpu.memory_space<vmem>>, vector<16x16xf32>
      %67 = vector.broadcast %65 : f32 to vector<16x16xf32>
      %68 = arith.mulf %67, %66 : vector<16x16xf32>
      %69 = arith.addf %64, %68 : vector<16x16xf32>
      %70 = arith.addf %60, %69 : vector<16x16xf32>
      %c0_64 = arith.constant 0 : index
      %c3_65 = arith.constant 3 : index
      %71 = memref.load %arg3[%c0_64, %c3_65] : memref<2x49xf32, #tpu.memory_space<smem>>
      %c0_66 = arith.constant 0 : index
      %c3_67 = arith.constant 3 : index
      %72 = vector.load %arg7[%c0_66, %c3_67] : memref<22x22xf32, #tpu.memory_space<vmem>>, vector<16x16xf32>
      %73 = vector.broadcast %71 : f32 to vector<16x16xf32>
      %74 = arith.mulf %73, %72 : vector<16x16xf32>
      %c1_68 = arith.constant 1 : index
      %c3_69 = arith.constant 3 : index
      %75 = memref.load %arg3[%c1_68, %c3_69] : memref<2x49xf32, #tpu.memory_space<smem>>
      %c0_70 = arith.constant 0 : index
      %c3_71 = arith.constant 3 : index
      %76 = vector.load %arg8[%c0_70, %c3_71] : memref<22x22xf32, #tpu.memory_space<vmem>>, vector<16x16xf32>
      %77 = vector.broadcast %75 : f32 to vector<16x16xf32>
      %78 = arith.mulf %77, %76 : vector<16x16xf32>
      %79 = arith.addf %74, %78 : vector<16x16xf32>
      %80 = arith.addf %70, %79 : vector<16x16xf32>
      %c0_72 = arith.constant 0 : index
      %c4 = arith.constant 4 : index
      %81 = memref.load %arg3[%c0_72, %c4] : memref<2x49xf32, #tpu.memory_space<smem>>
      %c0_73 = arith.constant 0 : index
      %c4_74 = arith.constant 4 : index
      %82 = vector.load %arg7[%c0_73, %c4_74] : memref<22x22xf32, #tpu.memory_space<vmem>>, vector<16x16xf32>
      %83 = vector.broadcast %81 : f32 to vector<16x16xf32>
      %84 = arith.mulf %83, %82 : vector<16x16xf32>
      %c1_75 = arith.constant 1 : index
      %c4_76 = arith.constant 4 : index
      %85 = memref.load %arg3[%c1_75, %c4_76] : memref<2x49xf32, #tpu.memory_space<smem>>
      %c0_77 = arith.constant 0 : index
      %c4_78 = arith.constant 4 : index
      %86 = vector.load %arg8[%c0_77, %c4_78] : memref<22x22xf32, #tpu.memory_space<vmem>>, vector<16x16xf32>
      %87 = vector.broadcast %85 : f32 to vector<16x16xf32>
      %88 = arith.mulf %87, %86 : vector<16x16xf32>
      %89 = arith.addf %84, %88 : vector<16x16xf32>
      %90 = arith.addf %80, %89 : vector<16x16xf32>
      %c0_79 = arith.constant 0 : index
      %c5 = arith.constant 5 : index
      %91 = memref.load %arg3[%c0_79, %c5] : memref<2x49xf32, #tpu.memory_space<smem>>
      %c0_80 = arith.constant 0 : index
      %c5_81 = arith.constant 5 : index
      %92 = vector.load %arg7[%c0_80, %c5_81] : memref<22x22xf32, #tpu.memory_space<vmem>>, vector<16x16xf32>
      %93 = vector.broadcast %91 : f32 to vector<16x16xf32>
      %94 = arith.mulf %93, %92 : vector<16x16xf32>
      %c1_82 = arith.constant 1 : index
      %c5_83 = arith.constant 5 : index
      %95 = memref.load %arg3[%c1_82, %c5_83] : memref<2x49xf32, #tpu.memory_space<smem>>
      %c0_84 = arith.constant 0 : index
      %c5_85 = arith.constant 5 : index
      %96 = vector.load %arg8[%c0_84, %c5_85] : memref<22x22xf32, #tpu.memory_space<vmem>>, vector<16x16xf32>
      %97 = vector.broadcast %95 : f32 to vector<16x16xf32>
      %98 = arith.mulf %97, %96 : vector<16x16xf32>
      %99 = arith.addf %94, %98 : vector<16x16xf32>
      %100 = arith.addf %90, %99 : vector<16x16xf32>
      %c0_86 = arith.constant 0 : index
      %c6 = arith.constant 6 : index
      %101 = memref.load %arg3[%c0_86, %c6] : memref<2x49xf32, #tpu.memory_space<smem>>
      %c0_87 = arith.constant 0 : index
      %c6_88 = arith.constant 6 : index
      %102 = vector.load %arg7[%c0_87, %c6_88] : memref<22x22xf32, #tpu.memory_space<vmem>>, vector<16x16xf32>
      %103 = vector.broadcast %101 : f32 to vector<16x16xf32>
      %104 = arith.mulf %103, %102 : vector<16x16xf32>
      %c1_89 = arith.constant 1 : index
      %c6_90 = arith.constant 6 : index
      %105 = memref.load %arg3[%c1_89, %c6_90] : memref<2x49xf32, #tpu.memory_space<smem>>
      %c0_91 = arith.constant 0 : index
      %c6_92 = arith.constant 6 : index
      %106 = vector.load %arg8[%c0_91, %c6_92] : memref<22x22xf32, #tpu.memory_space<vmem>>, vector<16x16xf32>
      %107 = vector.broadcast %105 : f32 to vector<16x16xf32>
      %108 = arith.mulf %107, %106 : vector<16x16xf32>
      %109 = arith.addf %104, %108 : vector<16x16xf32>
      %110 = arith.addf %100, %109 : vector<16x16xf32>
      %c0_93 = arith.constant 0 : index
      %c7 = arith.constant 7 : index
      %111 = memref.load %arg3[%c0_93, %c7] : memref<2x49xf32, #tpu.memory_space<smem>>
      %c1_94 = arith.constant 1 : index
      %c0_95 = arith.constant 0 : index
      %112 = vector.load %arg7[%c1_94, %c0_95] : memref<22x22xf32, #tpu.memory_space<vmem>>, vector<16x16xf32>
      %113 = vector.broadcast %111 : f32 to vector<16x16xf32>
      %114 = arith.mulf %113, %112 : vector<16x16xf32>
      %c1_96 = arith.constant 1 : index
      %c7_97 = arith.constant 7 : index
      %115 = memref.load %arg3[%c1_96, %c7_97] : memref<2x49xf32, #tpu.memory_space<smem>>
      %c1_98 = arith.constant 1 : index
      %c0_99 = arith.constant 0 : index
      %116 = vector.load %arg8[%c1_98, %c0_99] : memref<22x22xf32, #tpu.memory_space<vmem>>, vector<16x16xf32>
      %117 = vector.broadcast %115 : f32 to vector<16x16xf32>
      %118 = arith.mulf %117, %116 : vector<16x16xf32>
      %119 = arith.addf %114, %118 : vector<16x16xf32>
      %120 = arith.addf %110, %119 : vector<16x16xf32>
      %c0_100 = arith.constant 0 : index
      %c8 = arith.constant 8 : index
      %121 = memref.load %arg3[%c0_100, %c8] : memref<2x49xf32, #tpu.memory_space<smem>>
      %c1_101 = arith.constant 1 : index
      %c1_102 = arith.constant 1 : index
      %122 = vector.load %arg7[%c1_101, %c1_102] : memref<22x22xf32, #tpu.memory_space<vmem>>, vector<16x16xf32>
      %123 = vector.broadcast %121 : f32 to vector<16x16xf32>
      %124 = arith.mulf %123, %122 : vector<16x16xf32>
      %c1_103 = arith.constant 1 : index
      %c8_104 = arith.constant 8 : index
      %125 = memref.load %arg3[%c1_103, %c8_104] : memref<2x49xf32, #tpu.memory_space<smem>>
      %c1_105 = arith.constant 1 : index
      %c1_106 = arith.constant 1 : index
      %126 = vector.load %arg8[%c1_105, %c1_106] : memref<22x22xf32, #tpu.memory_space<vmem>>, vector<16x16xf32>
      %127 = vector.broadcast %125 : f32 to vector<16x16xf32>
      %128 = arith.mulf %127, %126 : vector<16x16xf32>
      %129 = arith.addf %124, %128 : vector<16x16xf32>
      %130 = arith.addf %120, %129 : vector<16x16xf32>
      %c0_107 = arith.constant 0 : index
      %c9 = arith.constant 9 : index
      %131 = memref.load %arg3[%c0_107, %c9] : memref<2x49xf32, #tpu.memory_space<smem>>
      %c1_108 = arith.constant 1 : index
      %c2_109 = arith.constant 2 : index
      %132 = vector.load %arg7[%c1_108, %c2_109] : memref<22x22xf32, #tpu.memory_space<vmem>>, vector<16x16xf32>
      %133 = vector.broadcast %131 : f32 to vector<16x16xf32>
      %134 = arith.mulf %133, %132 : vector<16x16xf32>
      %c1_110 = arith.constant 1 : index
      %c9_111 = arith.constant 9 : index
      %135 = memref.load %arg3[%c1_110, %c9_111] : memref<2x49xf32, #tpu.memory_space<smem>>
      %c1_112 = arith.constant 1 : index
      %c2_113 = arith.constant 2 : index
      %136 = vector.load %arg8[%c1_112, %c2_113] : memref<22x22xf32, #tpu.memory_space<vmem>>, vector<16x16xf32>
      %137 = vector.broadcast %135 : f32 to vector<16x16xf32>
      %138 = arith.mulf %137, %136 : vector<16x16xf32>
      %139 = arith.addf %134, %138 : vector<16x16xf32>
      %140 = arith.addf %130, %139 : vector<16x16xf32>
      %c0_114 = arith.constant 0 : index
      %c10 = arith.constant 10 : index
      %141 = memref.load %arg3[%c0_114, %c10] : memref<2x49xf32, #tpu.memory_space<smem>>
      %c1_115 = arith.constant 1 : index
      %c3_116 = arith.constant 3 : index
      %142 = vector.load %arg7[%c1_115, %c3_116] : memref<22x22xf32, #tpu.memory_space<vmem>>, vector<16x16xf32>
      %143 = vector.broadcast %141 : f32 to vector<16x16xf32>
      %144 = arith.mulf %143, %142 : vector<16x16xf32>
      %c1_117 = arith.constant 1 : index
      %c10_118 = arith.constant 10 : index
      %145 = memref.load %arg3[%c1_117, %c10_118] : memref<2x49xf32, #tpu.memory_space<smem>>
      %c1_119 = arith.constant 1 : index
      %c3_120 = arith.constant 3 : index
      %146 = vector.load %arg8[%c1_119, %c3_120] : memref<22x22xf32, #tpu.memory_space<vmem>>, vector<16x16xf32>
      %147 = vector.broadcast %145 : f32 to vector<16x16xf32>
      %148 = arith.mulf %147, %146 : vector<16x16xf32>
      %149 = arith.addf %144, %148 : vector<16x16xf32>
      %150 = arith.addf %140, %149 : vector<16x16xf32>
      %c0_121 = arith.constant 0 : index
      %c11 = arith.constant 11 : index
      %151 = memref.load %arg3[%c0_121, %c11] : memref<2x49xf32, #tpu.memory_space<smem>>
      %c1_122 = arith.constant 1 : index
      %c4_123 = arith.constant 4 : index
      %152 = vector.load %arg7[%c1_122, %c4_123] : memref<22x22xf32, #tpu.memory_space<vmem>>, vector<16x16xf32>
      %153 = vector.broadcast %151 : f32 to vector<16x16xf32>
      %154 = arith.mulf %153, %152 : vector<16x16xf32>
      %c1_124 = arith.constant 1 : index
      %c11_125 = arith.constant 11 : index
      %155 = memref.load %arg3[%c1_124, %c11_125] : memref<2x49xf32, #tpu.memory_space<smem>>
      %c1_126 = arith.constant 1 : index
      %c4_127 = arith.constant 4 : index
      %156 = vector.load %arg8[%c1_126, %c4_127] : memref<22x22xf32, #tpu.memory_space<vmem>>, vector<16x16xf32>
      %157 = vector.broadcast %155 : f32 to vector<16x16xf32>
      %158 = arith.mulf %157, %156 : vector<16x16xf32>
      %159 = arith.addf %154, %158 : vector<16x16xf32>
      %160 = arith.addf %150, %159 : vector<16x16xf32>
      %c0_128 = arith.constant 0 : index
      %c12 = arith.constant 12 : index
      %161 = memref.load %arg3[%c0_128, %c12] : memref<2x49xf32, #tpu.memory_space<smem>>
      %c1_129 = arith.constant 1 : index
      %c5_130 = arith.constant 5 : index
      %162 = vector.load %arg7[%c1_129, %c5_130] : memref<22x22xf32, #tpu.memory_space<vmem>>, vector<16x16xf32>
      %163 = vector.broadcast %161 : f32 to vector<16x16xf32>
      %164 = arith.mulf %163, %162 : vector<16x16xf32>
      %c1_131 = arith.constant 1 : index
      %c12_132 = arith.constant 12 : index
      %165 = memref.load %arg3[%c1_131, %c12_132] : memref<2x49xf32, #tpu.memory_space<smem>>
      %c1_133 = arith.constant 1 : index
      %c5_134 = arith.constant 5 : index
      %166 = vector.load %arg8[%c1_133, %c5_134] : memref<22x22xf32, #tpu.memory_space<vmem>>, vector<16x16xf32>
      %167 = vector.broadcast %165 : f32 to vector<16x16xf32>
      %168 = arith.mulf %167, %166 : vector<16x16xf32>
      %169 = arith.addf %164, %168 : vector<16x16xf32>
      %170 = arith.addf %160, %169 : vector<16x16xf32>
      %c0_135 = arith.constant 0 : index
      %c13 = arith.constant 13 : index
      %171 = memref.load %arg3[%c0_135, %c13] : memref<2x49xf32, #tpu.memory_space<smem>>
      %c1_136 = arith.constant 1 : index
      %c6_137 = arith.constant 6 : index
      %172 = vector.load %arg7[%c1_136, %c6_137] : memref<22x22xf32, #tpu.memory_space<vmem>>, vector<16x16xf32>
      %173 = vector.broadcast %171 : f32 to vector<16x16xf32>
      %174 = arith.mulf %173, %172 : vector<16x16xf32>
      %c1_138 = arith.constant 1 : index
      %c13_139 = arith.constant 13 : index
      %175 = memref.load %arg3[%c1_138, %c13_139] : memref<2x49xf32, #tpu.memory_space<smem>>
      %c1_140 = arith.constant 1 : index
      %c6_141 = arith.constant 6 : index
      %176 = vector.load %arg8[%c1_140, %c6_141] : memref<22x22xf32, #tpu.memory_space<vmem>>, vector<16x16xf32>
      %177 = vector.broadcast %175 : f32 to vector<16x16xf32>
      %178 = arith.mulf %177, %176 : vector<16x16xf32>
      %179 = arith.addf %174, %178 : vector<16x16xf32>
      %180 = arith.addf %170, %179 : vector<16x16xf32>
      %c0_142 = arith.constant 0 : index
      %c14 = arith.constant 14 : index
      %181 = memref.load %arg3[%c0_142, %c14] : memref<2x49xf32, #tpu.memory_space<smem>>
      %c2_143 = arith.constant 2 : index
      %c0_144 = arith.constant 0 : index
      %182 = vector.load %arg7[%c2_143, %c0_144] : memref<22x22xf32, #tpu.memory_space<vmem>>, vector<16x16xf32>
      %183 = vector.broadcast %181 : f32 to vector<16x16xf32>
      %184 = arith.mulf %183, %182 : vector<16x16xf32>
      %c1_145 = arith.constant 1 : index
      %c14_146 = arith.constant 14 : index
      %185 = memref.load %arg3[%c1_145, %c14_146] : memref<2x49xf32, #tpu.memory_space<smem>>
      %c2_147 = arith.constant 2 : index
      %c0_148 = arith.constant 0 : index
      %186 = vector.load %arg8[%c2_147, %c0_148] : memref<22x22xf32, #tpu.memory_space<vmem>>, vector<16x16xf32>
      %187 = vector.broadcast %185 : f32 to vector<16x16xf32>
      %188 = arith.mulf %187, %186 : vector<16x16xf32>
      %189 = arith.addf %184, %188 : vector<16x16xf32>
      %190 = arith.addf %180, %189 : vector<16x16xf32>
      %c0_149 = arith.constant 0 : index
      %c15 = arith.constant 15 : index
      %191 = memref.load %arg3[%c0_149, %c15] : memref<2x49xf32, #tpu.memory_space<smem>>
      %c2_150 = arith.constant 2 : index
      %c1_151 = arith.constant 1 : index
      %192 = vector.load %arg7[%c2_150, %c1_151] : memref<22x22xf32, #tpu.memory_space<vmem>>, vector<16x16xf32>
      %193 = vector.broadcast %191 : f32 to vector<16x16xf32>
      %194 = arith.mulf %193, %192 : vector<16x16xf32>
      %c1_152 = arith.constant 1 : index
      %c15_153 = arith.constant 15 : index
      %195 = memref.load %arg3[%c1_152, %c15_153] : memref<2x49xf32, #tpu.memory_space<smem>>
      %c2_154 = arith.constant 2 : index
      %c1_155 = arith.constant 1 : index
      %196 = vector.load %arg8[%c2_154, %c1_155] : memref<22x22xf32, #tpu.memory_space<vmem>>, vector<16x16xf32>
      %197 = vector.broadcast %195 : f32 to vector<16x16xf32>
      %198 = arith.mulf %197, %196 : vector<16x16xf32>
      %199 = arith.addf %194, %198 : vector<16x16xf32>
      %200 = arith.addf %190, %199 : vector<16x16xf32>
      %c0_156 = arith.constant 0 : index
      %c16 = arith.constant 16 : index
      %201 = memref.load %arg3[%c0_156, %c16] : memref<2x49xf32, #tpu.memory_space<smem>>
      %c2_157 = arith.constant 2 : index
      %c2_158 = arith.constant 2 : index
      %202 = vector.load %arg7[%c2_157, %c2_158] : memref<22x22xf32, #tpu.memory_space<vmem>>, vector<16x16xf32>
      %203 = vector.broadcast %201 : f32 to vector<16x16xf32>
      %204 = arith.mulf %203, %202 : vector<16x16xf32>
      %c1_159 = arith.constant 1 : index
      %c16_160 = arith.constant 16 : index
      %205 = memref.load %arg3[%c1_159, %c16_160] : memref<2x49xf32, #tpu.memory_space<smem>>
      %c2_161 = arith.constant 2 : index
      %c2_162 = arith.constant 2 : index
      %206 = vector.load %arg8[%c2_161, %c2_162] : memref<22x22xf32, #tpu.memory_space<vmem>>, vector<16x16xf32>
      %207 = vector.broadcast %205 : f32 to vector<16x16xf32>
      %208 = arith.mulf %207, %206 : vector<16x16xf32>
      %209 = arith.addf %204, %208 : vector<16x16xf32>
      %210 = arith.addf %200, %209 : vector<16x16xf32>
      %c0_163 = arith.constant 0 : index
      %c17 = arith.constant 17 : index
      %211 = memref.load %arg3[%c0_163, %c17] : memref<2x49xf32, #tpu.memory_space<smem>>
      %c2_164 = arith.constant 2 : index
      %c3_165 = arith.constant 3 : index
      %212 = vector.load %arg7[%c2_164, %c3_165] : memref<22x22xf32, #tpu.memory_space<vmem>>, vector<16x16xf32>
      %213 = vector.broadcast %211 : f32 to vector<16x16xf32>
      %214 = arith.mulf %213, %212 : vector<16x16xf32>
      %c1_166 = arith.constant 1 : index
      %c17_167 = arith.constant 17 : index
      %215 = memref.load %arg3[%c1_166, %c17_167] : memref<2x49xf32, #tpu.memory_space<smem>>
      %c2_168 = arith.constant 2 : index
      %c3_169 = arith.constant 3 : index
      %216 = vector.load %arg8[%c2_168, %c3_169] : memref<22x22xf32, #tpu.memory_space<vmem>>, vector<16x16xf32>
      %217 = vector.broadcast %215 : f32 to vector<16x16xf32>
      %218 = arith.mulf %217, %216 : vector<16x16xf32>
      %219 = arith.addf %214, %218 : vector<16x16xf32>
      %220 = arith.addf %210, %219 : vector<16x16xf32>
      %c0_170 = arith.constant 0 : index
      %c18 = arith.constant 18 : index
      %221 = memref.load %arg3[%c0_170, %c18] : memref<2x49xf32, #tpu.memory_space<smem>>
      %c2_171 = arith.constant 2 : index
      %c4_172 = arith.constant 4 : index
      %222 = vector.load %arg7[%c2_171, %c4_172] : memref<22x22xf32, #tpu.memory_space<vmem>>, vector<16x16xf32>
      %223 = vector.broadcast %221 : f32 to vector<16x16xf32>
      %224 = arith.mulf %223, %222 : vector<16x16xf32>
      %c1_173 = arith.constant 1 : index
      %c18_174 = arith.constant 18 : index
      %225 = memref.load %arg3[%c1_173, %c18_174] : memref<2x49xf32, #tpu.memory_space<smem>>
      %c2_175 = arith.constant 2 : index
      %c4_176 = arith.constant 4 : index
      %226 = vector.load %arg8[%c2_175, %c4_176] : memref<22x22xf32, #tpu.memory_space<vmem>>, vector<16x16xf32>
      %227 = vector.broadcast %225 : f32 to vector<16x16xf32>
      %228 = arith.mulf %227, %226 : vector<16x16xf32>
      %229 = arith.addf %224, %228 : vector<16x16xf32>
      %230 = arith.addf %220, %229 : vector<16x16xf32>
      %c0_177 = arith.constant 0 : index
      %c19 = arith.constant 19 : index
      %231 = memref.load %arg3[%c0_177, %c19] : memref<2x49xf32, #tpu.memory_space<smem>>
      %c2_178 = arith.constant 2 : index
      %c5_179 = arith.constant 5 : index
      %232 = vector.load %arg7[%c2_178, %c5_179] : memref<22x22xf32, #tpu.memory_space<vmem>>, vector<16x16xf32>
      %233 = vector.broadcast %231 : f32 to vector<16x16xf32>
      %234 = arith.mulf %233, %232 : vector<16x16xf32>
      %c1_180 = arith.constant 1 : index
      %c19_181 = arith.constant 19 : index
      %235 = memref.load %arg3[%c1_180, %c19_181] : memref<2x49xf32, #tpu.memory_space<smem>>
      %c2_182 = arith.constant 2 : index
      %c5_183 = arith.constant 5 : index
      %236 = vector.load %arg8[%c2_182, %c5_183] : memref<22x22xf32, #tpu.memory_space<vmem>>, vector<16x16xf32>
      %237 = vector.broadcast %235 : f32 to vector<16x16xf32>
      %238 = arith.mulf %237, %236 : vector<16x16xf32>
      %239 = arith.addf %234, %238 : vector<16x16xf32>
      %240 = arith.addf %230, %239 : vector<16x16xf32>
      %c0_184 = arith.constant 0 : index
      %c20 = arith.constant 20 : index
      %241 = memref.load %arg3[%c0_184, %c20] : memref<2x49xf32, #tpu.memory_space<smem>>
      %c2_185 = arith.constant 2 : index
      %c6_186 = arith.constant 6 : index
      %242 = vector.load %arg7[%c2_185, %c6_186] : memref<22x22xf32, #tpu.memory_space<vmem>>, vector<16x16xf32>
      %243 = vector.broadcast %241 : f32 to vector<16x16xf32>
      %244 = arith.mulf %243, %242 : vector<16x16xf32>
      %c1_187 = arith.constant 1 : index
      %c20_188 = arith.constant 20 : index
      %245 = memref.load %arg3[%c1_187, %c20_188] : memref<2x49xf32, #tpu.memory_space<smem>>
      %c2_189 = arith.constant 2 : index
      %c6_190 = arith.constant 6 : index
      %246 = vector.load %arg8[%c2_189, %c6_190] : memref<22x22xf32, #tpu.memory_space<vmem>>, vector<16x16xf32>
      %247 = vector.broadcast %245 : f32 to vector<16x16xf32>
      %248 = arith.mulf %247, %246 : vector<16x16xf32>
      %249 = arith.addf %244, %248 : vector<16x16xf32>
      %250 = arith.addf %240, %249 : vector<16x16xf32>
      %c0_191 = arith.constant 0 : index
      %c21 = arith.constant 21 : index
      %251 = memref.load %arg3[%c0_191, %c21] : memref<2x49xf32, #tpu.memory_space<smem>>
      %c3_192 = arith.constant 3 : index
      %c0_193 = arith.constant 0 : index
      %252 = vector.load %arg7[%c3_192, %c0_193] : memref<22x22xf32, #tpu.memory_space<vmem>>, vector<16x16xf32>
      %253 = vector.broadcast %251 : f32 to vector<16x16xf32>
      %254 = arith.mulf %253, %252 : vector<16x16xf32>
      %c1_194 = arith.constant 1 : index
      %c21_195 = arith.constant 21 : index
      %255 = memref.load %arg3[%c1_194, %c21_195] : memref<2x49xf32, #tpu.memory_space<smem>>
      %c3_196 = arith.constant 3 : index
      %c0_197 = arith.constant 0 : index
      %256 = vector.load %arg8[%c3_196, %c0_197] : memref<22x22xf32, #tpu.memory_space<vmem>>, vector<16x16xf32>
      %257 = vector.broadcast %255 : f32 to vector<16x16xf32>
      %258 = arith.mulf %257, %256 : vector<16x16xf32>
      %259 = arith.addf %254, %258 : vector<16x16xf32>
      %260 = arith.addf %250, %259 : vector<16x16xf32>
      %c0_198 = arith.constant 0 : index
      %c22 = arith.constant 22 : index
      %261 = memref.load %arg3[%c0_198, %c22] : memref<2x49xf32, #tpu.memory_space<smem>>
      %c3_199 = arith.constant 3 : index
      %c1_200 = arith.constant 1 : index
      %262 = vector.load %arg7[%c3_199, %c1_200] : memref<22x22xf32, #tpu.memory_space<vmem>>, vector<16x16xf32>
      %263 = vector.broadcast %261 : f32 to vector<16x16xf32>
      %264 = arith.mulf %263, %262 : vector<16x16xf32>
      %c1_201 = arith.constant 1 : index
      %c22_202 = arith.constant 22 : index
      %265 = memref.load %arg3[%c1_201, %c22_202] : memref<2x49xf32, #tpu.memory_space<smem>>
      %c3_203 = arith.constant 3 : index
      %c1_204 = arith.constant 1 : index
      %266 = vector.load %arg8[%c3_203, %c1_204] : memref<22x22xf32, #tpu.memory_space<vmem>>, vector<16x16xf32>
      %267 = vector.broadcast %265 : f32 to vector<16x16xf32>
      %268 = arith.mulf %267, %266 : vector<16x16xf32>
      %269 = arith.addf %264, %268 : vector<16x16xf32>
      %270 = arith.addf %260, %269 : vector<16x16xf32>
      %c0_205 = arith.constant 0 : index
      %c23 = arith.constant 23 : index
      %271 = memref.load %arg3[%c0_205, %c23] : memref<2x49xf32, #tpu.memory_space<smem>>
      %c3_206 = arith.constant 3 : index
      %c2_207 = arith.constant 2 : index
      %272 = vector.load %arg7[%c3_206, %c2_207] : memref<22x22xf32, #tpu.memory_space<vmem>>, vector<16x16xf32>
      %273 = vector.broadcast %271 : f32 to vector<16x16xf32>
      %274 = arith.mulf %273, %272 : vector<16x16xf32>
      %c1_208 = arith.constant 1 : index
      %c23_209 = arith.constant 23 : index
      %275 = memref.load %arg3[%c1_208, %c23_209] : memref<2x49xf32, #tpu.memory_space<smem>>
      %c3_210 = arith.constant 3 : index
      %c2_211 = arith.constant 2 : index
      %276 = vector.load %arg8[%c3_210, %c2_211] : memref<22x22xf32, #tpu.memory_space<vmem>>, vector<16x16xf32>
      %277 = vector.broadcast %275 : f32 to vector<16x16xf32>
      %278 = arith.mulf %277, %276 : vector<16x16xf32>
      %279 = arith.addf %274, %278 : vector<16x16xf32>
      %280 = arith.addf %270, %279 : vector<16x16xf32>
      %c0_212 = arith.constant 0 : index
      %c24 = arith.constant 24 : index
      %281 = memref.load %arg3[%c0_212, %c24] : memref<2x49xf32, #tpu.memory_space<smem>>
      %c3_213 = arith.constant 3 : index
      %c3_214 = arith.constant 3 : index
      %282 = vector.load %arg7[%c3_213, %c3_214] : memref<22x22xf32, #tpu.memory_space<vmem>>, vector<16x16xf32>
      %283 = vector.broadcast %281 : f32 to vector<16x16xf32>
      %284 = arith.mulf %283, %282 : vector<16x16xf32>
      %c1_215 = arith.constant 1 : index
      %c24_216 = arith.constant 24 : index
      %285 = memref.load %arg3[%c1_215, %c24_216] : memref<2x49xf32, #tpu.memory_space<smem>>
      %c3_217 = arith.constant 3 : index
      %c3_218 = arith.constant 3 : index
      %286 = vector.load %arg8[%c3_217, %c3_218] : memref<22x22xf32, #tpu.memory_space<vmem>>, vector<16x16xf32>
      %287 = vector.broadcast %285 : f32 to vector<16x16xf32>
      %288 = arith.mulf %287, %286 : vector<16x16xf32>
      %289 = arith.addf %284, %288 : vector<16x16xf32>
      %290 = arith.addf %280, %289 : vector<16x16xf32>
      %c0_219 = arith.constant 0 : index
      %c25 = arith.constant 25 : index
      %291 = memref.load %arg3[%c0_219, %c25] : memref<2x49xf32, #tpu.memory_space<smem>>
      %c3_220 = arith.constant 3 : index
      %c4_221 = arith.constant 4 : index
      %292 = vector.load %arg7[%c3_220, %c4_221] : memref<22x22xf32, #tpu.memory_space<vmem>>, vector<16x16xf32>
      %293 = vector.broadcast %291 : f32 to vector<16x16xf32>
      %294 = arith.mulf %293, %292 : vector<16x16xf32>
      %c1_222 = arith.constant 1 : index
      %c25_223 = arith.constant 25 : index
      %295 = memref.load %arg3[%c1_222, %c25_223] : memref<2x49xf32, #tpu.memory_space<smem>>
      %c3_224 = arith.constant 3 : index
      %c4_225 = arith.constant 4 : index
      %296 = vector.load %arg8[%c3_224, %c4_225] : memref<22x22xf32, #tpu.memory_space<vmem>>, vector<16x16xf32>
      %297 = vector.broadcast %295 : f32 to vector<16x16xf32>
      %298 = arith.mulf %297, %296 : vector<16x16xf32>
      %299 = arith.addf %294, %298 : vector<16x16xf32>
      %300 = arith.addf %290, %299 : vector<16x16xf32>
      %c0_226 = arith.constant 0 : index
      %c26 = arith.constant 26 : index
      %301 = memref.load %arg3[%c0_226, %c26] : memref<2x49xf32, #tpu.memory_space<smem>>
      %c3_227 = arith.constant 3 : index
      %c5_228 = arith.constant 5 : index
      %302 = vector.load %arg7[%c3_227, %c5_228] : memref<22x22xf32, #tpu.memory_space<vmem>>, vector<16x16xf32>
      %303 = vector.broadcast %301 : f32 to vector<16x16xf32>
      %304 = arith.mulf %303, %302 : vector<16x16xf32>
      %c1_229 = arith.constant 1 : index
      %c26_230 = arith.constant 26 : index
      %305 = memref.load %arg3[%c1_229, %c26_230] : memref<2x49xf32, #tpu.memory_space<smem>>
      %c3_231 = arith.constant 3 : index
      %c5_232 = arith.constant 5 : index
      %306 = vector.load %arg8[%c3_231, %c5_232] : memref<22x22xf32, #tpu.memory_space<vmem>>, vector<16x16xf32>
      %307 = vector.broadcast %305 : f32 to vector<16x16xf32>
      %308 = arith.mulf %307, %306 : vector<16x16xf32>
      %309 = arith.addf %304, %308 : vector<16x16xf32>
      %310 = arith.addf %300, %309 : vector<16x16xf32>
      %c0_233 = arith.constant 0 : index
      %c27 = arith.constant 27 : index
      %311 = memref.load %arg3[%c0_233, %c27] : memref<2x49xf32, #tpu.memory_space<smem>>
      %c3_234 = arith.constant 3 : index
      %c6_235 = arith.constant 6 : index
      %312 = vector.load %arg7[%c3_234, %c6_235] : memref<22x22xf32, #tpu.memory_space<vmem>>, vector<16x16xf32>
      %313 = vector.broadcast %311 : f32 to vector<16x16xf32>
      %314 = arith.mulf %313, %312 : vector<16x16xf32>
      %c1_236 = arith.constant 1 : index
      %c27_237 = arith.constant 27 : index
      %315 = memref.load %arg3[%c1_236, %c27_237] : memref<2x49xf32, #tpu.memory_space<smem>>
      %c3_238 = arith.constant 3 : index
      %c6_239 = arith.constant 6 : index
      %316 = vector.load %arg8[%c3_238, %c6_239] : memref<22x22xf32, #tpu.memory_space<vmem>>, vector<16x16xf32>
      %317 = vector.broadcast %315 : f32 to vector<16x16xf32>
      %318 = arith.mulf %317, %316 : vector<16x16xf32>
      %319 = arith.addf %314, %318 : vector<16x16xf32>
      %320 = arith.addf %310, %319 : vector<16x16xf32>
      %c0_240 = arith.constant 0 : index
      %c28 = arith.constant 28 : index
      %321 = memref.load %arg3[%c0_240, %c28] : memref<2x49xf32, #tpu.memory_space<smem>>
      %c4_241 = arith.constant 4 : index
      %c0_242 = arith.constant 0 : index
      %322 = vector.load %arg7[%c4_241, %c0_242] : memref<22x22xf32, #tpu.memory_space<vmem>>, vector<16x16xf32>
      %323 = vector.broadcast %321 : f32 to vector<16x16xf32>
      %324 = arith.mulf %323, %322 : vector<16x16xf32>
      %c1_243 = arith.constant 1 : index
      %c28_244 = arith.constant 28 : index
      %325 = memref.load %arg3[%c1_243, %c28_244] : memref<2x49xf32, #tpu.memory_space<smem>>
      %c4_245 = arith.constant 4 : index
      %c0_246 = arith.constant 0 : index
      %326 = vector.load %arg8[%c4_245, %c0_246] : memref<22x22xf32, #tpu.memory_space<vmem>>, vector<16x16xf32>
      %327 = vector.broadcast %325 : f32 to vector<16x16xf32>
      %328 = arith.mulf %327, %326 : vector<16x16xf32>
      %329 = arith.addf %324, %328 : vector<16x16xf32>
      %330 = arith.addf %320, %329 : vector<16x16xf32>
      %c0_247 = arith.constant 0 : index
      %c29 = arith.constant 29 : index
      %331 = memref.load %arg3[%c0_247, %c29] : memref<2x49xf32, #tpu.memory_space<smem>>
      %c4_248 = arith.constant 4 : index
      %c1_249 = arith.constant 1 : index
      %332 = vector.load %arg7[%c4_248, %c1_249] : memref<22x22xf32, #tpu.memory_space<vmem>>, vector<16x16xf32>
      %333 = vector.broadcast %331 : f32 to vector<16x16xf32>
      %334 = arith.mulf %333, %332 : vector<16x16xf32>
      %c1_250 = arith.constant 1 : index
      %c29_251 = arith.constant 29 : index
      %335 = memref.load %arg3[%c1_250, %c29_251] : memref<2x49xf32, #tpu.memory_space<smem>>
      %c4_252 = arith.constant 4 : index
      %c1_253 = arith.constant 1 : index
      %336 = vector.load %arg8[%c4_252, %c1_253] : memref<22x22xf32, #tpu.memory_space<vmem>>, vector<16x16xf32>
      %337 = vector.broadcast %335 : f32 to vector<16x16xf32>
      %338 = arith.mulf %337, %336 : vector<16x16xf32>
      %339 = arith.addf %334, %338 : vector<16x16xf32>
      %340 = arith.addf %330, %339 : vector<16x16xf32>
      %c0_254 = arith.constant 0 : index
      %c30 = arith.constant 30 : index
      %341 = memref.load %arg3[%c0_254, %c30] : memref<2x49xf32, #tpu.memory_space<smem>>
      %c4_255 = arith.constant 4 : index
      %c2_256 = arith.constant 2 : index
      %342 = vector.load %arg7[%c4_255, %c2_256] : memref<22x22xf32, #tpu.memory_space<vmem>>, vector<16x16xf32>
      %343 = vector.broadcast %341 : f32 to vector<16x16xf32>
      %344 = arith.mulf %343, %342 : vector<16x16xf32>
      %c1_257 = arith.constant 1 : index
      %c30_258 = arith.constant 30 : index
      %345 = memref.load %arg3[%c1_257, %c30_258] : memref<2x49xf32, #tpu.memory_space<smem>>
      %c4_259 = arith.constant 4 : index
      %c2_260 = arith.constant 2 : index
      %346 = vector.load %arg8[%c4_259, %c2_260] : memref<22x22xf32, #tpu.memory_space<vmem>>, vector<16x16xf32>
      %347 = vector.broadcast %345 : f32 to vector<16x16xf32>
      %348 = arith.mulf %347, %346 : vector<16x16xf32>
      %349 = arith.addf %344, %348 : vector<16x16xf32>
      %350 = arith.addf %340, %349 : vector<16x16xf32>
      %c0_261 = arith.constant 0 : index
      %c31 = arith.constant 31 : index
      %351 = memref.load %arg3[%c0_261, %c31] : memref<2x49xf32, #tpu.memory_space<smem>>
      %c4_262 = arith.constant 4 : index
      %c3_263 = arith.constant 3 : index
      %352 = vector.load %arg7[%c4_262, %c3_263] : memref<22x22xf32, #tpu.memory_space<vmem>>, vector<16x16xf32>
      %353 = vector.broadcast %351 : f32 to vector<16x16xf32>
      %354 = arith.mulf %353, %352 : vector<16x16xf32>
      %c1_264 = arith.constant 1 : index
      %c31_265 = arith.constant 31 : index
      %355 = memref.load %arg3[%c1_264, %c31_265] : memref<2x49xf32, #tpu.memory_space<smem>>
      %c4_266 = arith.constant 4 : index
      %c3_267 = arith.constant 3 : index
      %356 = vector.load %arg8[%c4_266, %c3_267] : memref<22x22xf32, #tpu.memory_space<vmem>>, vector<16x16xf32>
      %357 = vector.broadcast %355 : f32 to vector<16x16xf32>
      %358 = arith.mulf %357, %356 : vector<16x16xf32>
      %359 = arith.addf %354, %358 : vector<16x16xf32>
      %360 = arith.addf %350, %359 : vector<16x16xf32>
      %c0_268 = arith.constant 0 : index
      %c32 = arith.constant 32 : index
      %361 = memref.load %arg3[%c0_268, %c32] : memref<2x49xf32, #tpu.memory_space<smem>>
      %c4_269 = arith.constant 4 : index
      %c4_270 = arith.constant 4 : index
      %362 = vector.load %arg7[%c4_269, %c4_270] : memref<22x22xf32, #tpu.memory_space<vmem>>, vector<16x16xf32>
      %363 = vector.broadcast %361 : f32 to vector<16x16xf32>
      %364 = arith.mulf %363, %362 : vector<16x16xf32>
      %c1_271 = arith.constant 1 : index
      %c32_272 = arith.constant 32 : index
      %365 = memref.load %arg3[%c1_271, %c32_272] : memref<2x49xf32, #tpu.memory_space<smem>>
      %c4_273 = arith.constant 4 : index
      %c4_274 = arith.constant 4 : index
      %366 = vector.load %arg8[%c4_273, %c4_274] : memref<22x22xf32, #tpu.memory_space<vmem>>, vector<16x16xf32>
      %367 = vector.broadcast %365 : f32 to vector<16x16xf32>
      %368 = arith.mulf %367, %366 : vector<16x16xf32>
      %369 = arith.addf %364, %368 : vector<16x16xf32>
      %370 = arith.addf %360, %369 : vector<16x16xf32>
      %c0_275 = arith.constant 0 : index
      %c33 = arith.constant 33 : index
      %371 = memref.load %arg3[%c0_275, %c33] : memref<2x49xf32, #tpu.memory_space<smem>>
      %c4_276 = arith.constant 4 : index
      %c5_277 = arith.constant 5 : index
      %372 = vector.load %arg7[%c4_276, %c5_277] : memref<22x22xf32, #tpu.memory_space<vmem>>, vector<16x16xf32>
      %373 = vector.broadcast %371 : f32 to vector<16x16xf32>
      %374 = arith.mulf %373, %372 : vector<16x16xf32>
      %c1_278 = arith.constant 1 : index
      %c33_279 = arith.constant 33 : index
      %375 = memref.load %arg3[%c1_278, %c33_279] : memref<2x49xf32, #tpu.memory_space<smem>>
      %c4_280 = arith.constant 4 : index
      %c5_281 = arith.constant 5 : index
      %376 = vector.load %arg8[%c4_280, %c5_281] : memref<22x22xf32, #tpu.memory_space<vmem>>, vector<16x16xf32>
      %377 = vector.broadcast %375 : f32 to vector<16x16xf32>
      %378 = arith.mulf %377, %376 : vector<16x16xf32>
      %379 = arith.addf %374, %378 : vector<16x16xf32>
      %380 = arith.addf %370, %379 : vector<16x16xf32>
      %c0_282 = arith.constant 0 : index
      %c34 = arith.constant 34 : index
      %381 = memref.load %arg3[%c0_282, %c34] : memref<2x49xf32, #tpu.memory_space<smem>>
      %c4_283 = arith.constant 4 : index
      %c6_284 = arith.constant 6 : index
      %382 = vector.load %arg7[%c4_283, %c6_284] : memref<22x22xf32, #tpu.memory_space<vmem>>, vector<16x16xf32>
      %383 = vector.broadcast %381 : f32 to vector<16x16xf32>
      %384 = arith.mulf %383, %382 : vector<16x16xf32>
      %c1_285 = arith.constant 1 : index
      %c34_286 = arith.constant 34 : index
      %385 = memref.load %arg3[%c1_285, %c34_286] : memref<2x49xf32, #tpu.memory_space<smem>>
      %c4_287 = arith.constant 4 : index
      %c6_288 = arith.constant 6 : index
      %386 = vector.load %arg8[%c4_287, %c6_288] : memref<22x22xf32, #tpu.memory_space<vmem>>, vector<16x16xf32>
      %387 = vector.broadcast %385 : f32 to vector<16x16xf32>
      %388 = arith.mulf %387, %386 : vector<16x16xf32>
      %389 = arith.addf %384, %388 : vector<16x16xf32>
      %390 = arith.addf %380, %389 : vector<16x16xf32>
      %c0_289 = arith.constant 0 : index
      %c35 = arith.constant 35 : index
      %391 = memref.load %arg3[%c0_289, %c35] : memref<2x49xf32, #tpu.memory_space<smem>>
      %c5_290 = arith.constant 5 : index
      %c0_291 = arith.constant 0 : index
      %392 = vector.load %arg7[%c5_290, %c0_291] : memref<22x22xf32, #tpu.memory_space<vmem>>, vector<16x16xf32>
      %393 = vector.broadcast %391 : f32 to vector<16x16xf32>
      %394 = arith.mulf %393, %392 : vector<16x16xf32>
      %c1_292 = arith.constant 1 : index
      %c35_293 = arith.constant 35 : index
      %395 = memref.load %arg3[%c1_292, %c35_293] : memref<2x49xf32, #tpu.memory_space<smem>>
      %c5_294 = arith.constant 5 : index
      %c0_295 = arith.constant 0 : index
      %396 = vector.load %arg8[%c5_294, %c0_295] : memref<22x22xf32, #tpu.memory_space<vmem>>, vector<16x16xf32>
      %397 = vector.broadcast %395 : f32 to vector<16x16xf32>
      %398 = arith.mulf %397, %396 : vector<16x16xf32>
      %399 = arith.addf %394, %398 : vector<16x16xf32>
      %400 = arith.addf %390, %399 : vector<16x16xf32>
      %c0_296 = arith.constant 0 : index
      %c36 = arith.constant 36 : index
      %401 = memref.load %arg3[%c0_296, %c36] : memref<2x49xf32, #tpu.memory_space<smem>>
      %c5_297 = arith.constant 5 : index
      %c1_298 = arith.constant 1 : index
      %402 = vector.load %arg7[%c5_297, %c1_298] : memref<22x22xf32, #tpu.memory_space<vmem>>, vector<16x16xf32>
      %403 = vector.broadcast %401 : f32 to vector<16x16xf32>
      %404 = arith.mulf %403, %402 : vector<16x16xf32>
      %c1_299 = arith.constant 1 : index
      %c36_300 = arith.constant 36 : index
      %405 = memref.load %arg3[%c1_299, %c36_300] : memref<2x49xf32, #tpu.memory_space<smem>>
      %c5_301 = arith.constant 5 : index
      %c1_302 = arith.constant 1 : index
      %406 = vector.load %arg8[%c5_301, %c1_302] : memref<22x22xf32, #tpu.memory_space<vmem>>, vector<16x16xf32>
      %407 = vector.broadcast %405 : f32 to vector<16x16xf32>
      %408 = arith.mulf %407, %406 : vector<16x16xf32>
      %409 = arith.addf %404, %408 : vector<16x16xf32>
      %410 = arith.addf %400, %409 : vector<16x16xf32>
      %c0_303 = arith.constant 0 : index
      %c37 = arith.constant 37 : index
      %411 = memref.load %arg3[%c0_303, %c37] : memref<2x49xf32, #tpu.memory_space<smem>>
      %c5_304 = arith.constant 5 : index
      %c2_305 = arith.constant 2 : index
      %412 = vector.load %arg7[%c5_304, %c2_305] : memref<22x22xf32, #tpu.memory_space<vmem>>, vector<16x16xf32>
      %413 = vector.broadcast %411 : f32 to vector<16x16xf32>
      %414 = arith.mulf %413, %412 : vector<16x16xf32>
      %c1_306 = arith.constant 1 : index
      %c37_307 = arith.constant 37 : index
      %415 = memref.load %arg3[%c1_306, %c37_307] : memref<2x49xf32, #tpu.memory_space<smem>>
      %c5_308 = arith.constant 5 : index
      %c2_309 = arith.constant 2 : index
      %416 = vector.load %arg8[%c5_308, %c2_309] : memref<22x22xf32, #tpu.memory_space<vmem>>, vector<16x16xf32>
      %417 = vector.broadcast %415 : f32 to vector<16x16xf32>
      %418 = arith.mulf %417, %416 : vector<16x16xf32>
      %419 = arith.addf %414, %418 : vector<16x16xf32>
      %420 = arith.addf %410, %419 : vector<16x16xf32>
      %c0_310 = arith.constant 0 : index
      %c38 = arith.constant 38 : index
      %421 = memref.load %arg3[%c0_310, %c38] : memref<2x49xf32, #tpu.memory_space<smem>>
      %c5_311 = arith.constant 5 : index
      %c3_312 = arith.constant 3 : index
      %422 = vector.load %arg7[%c5_311, %c3_312] : memref<22x22xf32, #tpu.memory_space<vmem>>, vector<16x16xf32>
      %423 = vector.broadcast %421 : f32 to vector<16x16xf32>
      %424 = arith.mulf %423, %422 : vector<16x16xf32>
      %c1_313 = arith.constant 1 : index
      %c38_314 = arith.constant 38 : index
      %425 = memref.load %arg3[%c1_313, %c38_314] : memref<2x49xf32, #tpu.memory_space<smem>>
      %c5_315 = arith.constant 5 : index
      %c3_316 = arith.constant 3 : index
      %426 = vector.load %arg8[%c5_315, %c3_316] : memref<22x22xf32, #tpu.memory_space<vmem>>, vector<16x16xf32>
      %427 = vector.broadcast %425 : f32 to vector<16x16xf32>
      %428 = arith.mulf %427, %426 : vector<16x16xf32>
      %429 = arith.addf %424, %428 : vector<16x16xf32>
      %430 = arith.addf %420, %429 : vector<16x16xf32>
      %c0_317 = arith.constant 0 : index
      %c39 = arith.constant 39 : index
      %431 = memref.load %arg3[%c0_317, %c39] : memref<2x49xf32, #tpu.memory_space<smem>>
      %c5_318 = arith.constant 5 : index
      %c4_319 = arith.constant 4 : index
      %432 = vector.load %arg7[%c5_318, %c4_319] : memref<22x22xf32, #tpu.memory_space<vmem>>, vector<16x16xf32>
      %433 = vector.broadcast %431 : f32 to vector<16x16xf32>
      %434 = arith.mulf %433, %432 : vector<16x16xf32>
      %c1_320 = arith.constant 1 : index
      %c39_321 = arith.constant 39 : index
      %435 = memref.load %arg3[%c1_320, %c39_321] : memref<2x49xf32, #tpu.memory_space<smem>>
      %c5_322 = arith.constant 5 : index
      %c4_323 = arith.constant 4 : index
      %436 = vector.load %arg8[%c5_322, %c4_323] : memref<22x22xf32, #tpu.memory_space<vmem>>, vector<16x16xf32>
      %437 = vector.broadcast %435 : f32 to vector<16x16xf32>
      %438 = arith.mulf %437, %436 : vector<16x16xf32>
      %439 = arith.addf %434, %438 : vector<16x16xf32>
      %440 = arith.addf %430, %439 : vector<16x16xf32>
      %c0_324 = arith.constant 0 : index
      %c40 = arith.constant 40 : index
      %441 = memref.load %arg3[%c0_324, %c40] : memref<2x49xf32, #tpu.memory_space<smem>>
      %c5_325 = arith.constant 5 : index
      %c5_326 = arith.constant 5 : index
      %442 = vector.load %arg7[%c5_325, %c5_326] : memref<22x22xf32, #tpu.memory_space<vmem>>, vector<16x16xf32>
      %443 = vector.broadcast %441 : f32 to vector<16x16xf32>
      %444 = arith.mulf %443, %442 : vector<16x16xf32>
      %c1_327 = arith.constant 1 : index
      %c40_328 = arith.constant 40 : index
      %445 = memref.load %arg3[%c1_327, %c40_328] : memref<2x49xf32, #tpu.memory_space<smem>>
      %c5_329 = arith.constant 5 : index
      %c5_330 = arith.constant 5 : index
      %446 = vector.load %arg8[%c5_329, %c5_330] : memref<22x22xf32, #tpu.memory_space<vmem>>, vector<16x16xf32>
      %447 = vector.broadcast %445 : f32 to vector<16x16xf32>
      %448 = arith.mulf %447, %446 : vector<16x16xf32>
      %449 = arith.addf %444, %448 : vector<16x16xf32>
      %450 = arith.addf %440, %449 : vector<16x16xf32>
      %c0_331 = arith.constant 0 : index
      %c41 = arith.constant 41 : index
      %451 = memref.load %arg3[%c0_331, %c41] : memref<2x49xf32, #tpu.memory_space<smem>>
      %c5_332 = arith.constant 5 : index
      %c6_333 = arith.constant 6 : index
      %452 = vector.load %arg7[%c5_332, %c6_333] : memref<22x22xf32, #tpu.memory_space<vmem>>, vector<16x16xf32>
      %453 = vector.broadcast %451 : f32 to vector<16x16xf32>
      %454 = arith.mulf %453, %452 : vector<16x16xf32>
      %c1_334 = arith.constant 1 : index
      %c41_335 = arith.constant 41 : index
      %455 = memref.load %arg3[%c1_334, %c41_335] : memref<2x49xf32, #tpu.memory_space<smem>>
      %c5_336 = arith.constant 5 : index
      %c6_337 = arith.constant 6 : index
      %456 = vector.load %arg8[%c5_336, %c6_337] : memref<22x22xf32, #tpu.memory_space<vmem>>, vector<16x16xf32>
      %457 = vector.broadcast %455 : f32 to vector<16x16xf32>
      %458 = arith.mulf %457, %456 : vector<16x16xf32>
      %459 = arith.addf %454, %458 : vector<16x16xf32>
      %460 = arith.addf %450, %459 : vector<16x16xf32>
      %c0_338 = arith.constant 0 : index
      %c42 = arith.constant 42 : index
      %461 = memref.load %arg3[%c0_338, %c42] : memref<2x49xf32, #tpu.memory_space<smem>>
      %c6_339 = arith.constant 6 : index
      %c0_340 = arith.constant 0 : index
      %462 = vector.load %arg7[%c6_339, %c0_340] : memref<22x22xf32, #tpu.memory_space<vmem>>, vector<16x16xf32>
      %463 = vector.broadcast %461 : f32 to vector<16x16xf32>
      %464 = arith.mulf %463, %462 : vector<16x16xf32>
      %c1_341 = arith.constant 1 : index
      %c42_342 = arith.constant 42 : index
      %465 = memref.load %arg3[%c1_341, %c42_342] : memref<2x49xf32, #tpu.memory_space<smem>>
      %c6_343 = arith.constant 6 : index
      %c0_344 = arith.constant 0 : index
      %466 = vector.load %arg8[%c6_343, %c0_344] : memref<22x22xf32, #tpu.memory_space<vmem>>, vector<16x16xf32>
      %467 = vector.broadcast %465 : f32 to vector<16x16xf32>
      %468 = arith.mulf %467, %466 : vector<16x16xf32>
      %469 = arith.addf %464, %468 : vector<16x16xf32>
      %470 = arith.addf %460, %469 : vector<16x16xf32>
      %c0_345 = arith.constant 0 : index
      %c43 = arith.constant 43 : index
      %471 = memref.load %arg3[%c0_345, %c43] : memref<2x49xf32, #tpu.memory_space<smem>>
      %c6_346 = arith.constant 6 : index
      %c1_347 = arith.constant 1 : index
      %472 = vector.load %arg7[%c6_346, %c1_347] : memref<22x22xf32, #tpu.memory_space<vmem>>, vector<16x16xf32>
      %473 = vector.broadcast %471 : f32 to vector<16x16xf32>
      %474 = arith.mulf %473, %472 : vector<16x16xf32>
      %c1_348 = arith.constant 1 : index
      %c43_349 = arith.constant 43 : index
      %475 = memref.load %arg3[%c1_348, %c43_349] : memref<2x49xf32, #tpu.memory_space<smem>>
      %c6_350 = arith.constant 6 : index
      %c1_351 = arith.constant 1 : index
      %476 = vector.load %arg8[%c6_350, %c1_351] : memref<22x22xf32, #tpu.memory_space<vmem>>, vector<16x16xf32>
      %477 = vector.broadcast %475 : f32 to vector<16x16xf32>
      %478 = arith.mulf %477, %476 : vector<16x16xf32>
      %479 = arith.addf %474, %478 : vector<16x16xf32>
      %480 = arith.addf %470, %479 : vector<16x16xf32>
      %c0_352 = arith.constant 0 : index
      %c44 = arith.constant 44 : index
      %481 = memref.load %arg3[%c0_352, %c44] : memref<2x49xf32, #tpu.memory_space<smem>>
      %c6_353 = arith.constant 6 : index
      %c2_354 = arith.constant 2 : index
      %482 = vector.load %arg7[%c6_353, %c2_354] : memref<22x22xf32, #tpu.memory_space<vmem>>, vector<16x16xf32>
      %483 = vector.broadcast %481 : f32 to vector<16x16xf32>
      %484 = arith.mulf %483, %482 : vector<16x16xf32>
      %c1_355 = arith.constant 1 : index
      %c44_356 = arith.constant 44 : index
      %485 = memref.load %arg3[%c1_355, %c44_356] : memref<2x49xf32, #tpu.memory_space<smem>>
      %c6_357 = arith.constant 6 : index
      %c2_358 = arith.constant 2 : index
      %486 = vector.load %arg8[%c6_357, %c2_358] : memref<22x22xf32, #tpu.memory_space<vmem>>, vector<16x16xf32>
      %487 = vector.broadcast %485 : f32 to vector<16x16xf32>
      %488 = arith.mulf %487, %486 : vector<16x16xf32>
      %489 = arith.addf %484, %488 : vector<16x16xf32>
      %490 = arith.addf %480, %489 : vector<16x16xf32>
      %c0_359 = arith.constant 0 : index
      %c45 = arith.constant 45 : index
      %491 = memref.load %arg3[%c0_359, %c45] : memref<2x49xf32, #tpu.memory_space<smem>>
      %c6_360 = arith.constant 6 : index
      %c3_361 = arith.constant 3 : index
      %492 = vector.load %arg7[%c6_360, %c3_361] : memref<22x22xf32, #tpu.memory_space<vmem>>, vector<16x16xf32>
      %493 = vector.broadcast %491 : f32 to vector<16x16xf32>
      %494 = arith.mulf %493, %492 : vector<16x16xf32>
      %c1_362 = arith.constant 1 : index
      %c45_363 = arith.constant 45 : index
      %495 = memref.load %arg3[%c1_362, %c45_363] : memref<2x49xf32, #tpu.memory_space<smem>>
      %c6_364 = arith.constant 6 : index
      %c3_365 = arith.constant 3 : index
      %496 = vector.load %arg8[%c6_364, %c3_365] : memref<22x22xf32, #tpu.memory_space<vmem>>, vector<16x16xf32>
      %497 = vector.broadcast %495 : f32 to vector<16x16xf32>
      %498 = arith.mulf %497, %496 : vector<16x16xf32>
      %499 = arith.addf %494, %498 : vector<16x16xf32>
      %500 = arith.addf %490, %499 : vector<16x16xf32>
      %c0_366 = arith.constant 0 : index
      %c46 = arith.constant 46 : index
      %501 = memref.load %arg3[%c0_366, %c46] : memref<2x49xf32, #tpu.memory_space<smem>>
      %c6_367 = arith.constant 6 : index
      %c4_368 = arith.constant 4 : index
      %502 = vector.load %arg7[%c6_367, %c4_368] : memref<22x22xf32, #tpu.memory_space<vmem>>, vector<16x16xf32>
      %503 = vector.broadcast %501 : f32 to vector<16x16xf32>
      %504 = arith.mulf %503, %502 : vector<16x16xf32>
      %c1_369 = arith.constant 1 : index
      %c46_370 = arith.constant 46 : index
      %505 = memref.load %arg3[%c1_369, %c46_370] : memref<2x49xf32, #tpu.memory_space<smem>>
      %c6_371 = arith.constant 6 : index
      %c4_372 = arith.constant 4 : index
      %506 = vector.load %arg8[%c6_371, %c4_372] : memref<22x22xf32, #tpu.memory_space<vmem>>, vector<16x16xf32>
      %507 = vector.broadcast %505 : f32 to vector<16x16xf32>
      %508 = arith.mulf %507, %506 : vector<16x16xf32>
      %509 = arith.addf %504, %508 : vector<16x16xf32>
      %510 = arith.addf %500, %509 : vector<16x16xf32>
      %c0_373 = arith.constant 0 : index
      %c47 = arith.constant 47 : index
      %511 = memref.load %arg3[%c0_373, %c47] : memref<2x49xf32, #tpu.memory_space<smem>>
      %c6_374 = arith.constant 6 : index
      %c5_375 = arith.constant 5 : index
      %512 = vector.load %arg7[%c6_374, %c5_375] : memref<22x22xf32, #tpu.memory_space<vmem>>, vector<16x16xf32>
      %513 = vector.broadcast %511 : f32 to vector<16x16xf32>
      %514 = arith.mulf %513, %512 : vector<16x16xf32>
      %c1_376 = arith.constant 1 : index
      %c47_377 = arith.constant 47 : index
      %515 = memref.load %arg3[%c1_376, %c47_377] : memref<2x49xf32, #tpu.memory_space<smem>>
      %c6_378 = arith.constant 6 : index
      %c5_379 = arith.constant 5 : index
      %516 = vector.load %arg8[%c6_378, %c5_379] : memref<22x22xf32, #tpu.memory_space<vmem>>, vector<16x16xf32>
      %517 = vector.broadcast %515 : f32 to vector<16x16xf32>
      %518 = arith.mulf %517, %516 : vector<16x16xf32>
      %519 = arith.addf %514, %518 : vector<16x16xf32>
      %520 = arith.addf %510, %519 : vector<16x16xf32>
      %c0_380 = arith.constant 0 : index
      %c48 = arith.constant 48 : index
      %521 = memref.load %arg3[%c0_380, %c48] : memref<2x49xf32, #tpu.memory_space<smem>>
      %c6_381 = arith.constant 6 : index
      %c6_382 = arith.constant 6 : index
      %522 = vector.load %arg7[%c6_381, %c6_382] : memref<22x22xf32, #tpu.memory_space<vmem>>, vector<16x16xf32>
      %523 = vector.broadcast %521 : f32 to vector<16x16xf32>
      %524 = arith.mulf %523, %522 : vector<16x16xf32>
      %c1_383 = arith.constant 1 : index
      %c48_384 = arith.constant 48 : index
      %525 = memref.load %arg3[%c1_383, %c48_384] : memref<2x49xf32, #tpu.memory_space<smem>>
      %c6_385 = arith.constant 6 : index
      %c6_386 = arith.constant 6 : index
      %526 = vector.load %arg8[%c6_385, %c6_386] : memref<22x22xf32, #tpu.memory_space<vmem>>, vector<16x16xf32>
      %527 = vector.broadcast %525 : f32 to vector<16x16xf32>
      %528 = arith.mulf %527, %526 : vector<16x16xf32>
      %529 = arith.addf %524, %528 : vector<16x16xf32>
      %530 = arith.addf %520, %529 : vector<16x16xf32>
      %531 = arith.negf %530 : vector<16x16xf32>
      %532 = math.exp %531 : vector<16x16xf32>
      %cst_387 = arith.constant 1.000000e+00 : f32
      %533 = vector.broadcast %cst_387 : f32 to vector<16x16xf32>
      %534 = arith.addf %533, %532 : vector<16x16xf32>
      %535 = arith.divf %533, %534 : vector<16x16xf32>
      %c0_388 = arith.constant 0 : index
      %c0_389 = arith.constant 0 : index
      %c0_390 = arith.constant 0 : index
      %536 = vector.load %arg4[%c0_388, %c0_389, %c0_390] : memref<1x16x16xf32, #tpu.memory_space<vmem>>, vector<1x16x16xf32>
      %537 = vector.shape_cast %536 : vector<1x16x16xf32> to vector<16x16xf32>
      %538 = vector.shape_cast %535 : vector<16x16xf32> to vector<1x16x16xf32>
      tpu.vector_store %arg4[%c0_388, %c0_389, %c0_390], %538 {strides = array<i32>} : memref<1x16x16xf32, #tpu.memory_space<vmem>>, vector<1x16x16xf32>,
    } else {
    }
    return
  }
  func.func @transform_0(%arg0: i32, %arg1: i32) -> (i32, i32, i32, i32) {
    %c0_i32 = arith.constant 0 : i32
    %c0_i32_0 = arith.constant 0 : i32
    %c0_i32_1 = arith.constant 0 : i32
    return %arg0, %arg1, %c0_i32, %c0_i32_0 : i32, i32, i32, i32
  }
  func.func @transform_1(%arg0: i32, %arg1: i32) -> (i32, i32) {
    %c0_i32 = arith.constant 0 : i32
    %c0_i32_0 = arith.constant 0 : i32
    %c0_i32_1 = arith.constant 0 : i32
    return %c0_i32, %c0_i32_0 : i32, i32
  }
  func.func @transform_2(%arg0: i32, %arg1: i32) -> (i32, i32, i32) {
    %c0_i32 = arith.constant 0 : i32
    %c0_i32_0 = arith.constant 0 : i32
    %c0_i32_1 = arith.constant 0 : i32
    return %arg0, %c0_i32, %c0_i32_0 : i32, i32, i32
  }
}

</mosaic_0001>

<llo_original>
// kernel: spatial_attention.1
$region0: #{spatial_attention.1}
  #allocation0 [shape = 'u32[]', space=smem, size = 0x4, offset = 0x4, fixed_abs, tag = 'smem constant byte address 0x4 - core index']
  #allocation1 [shape = 'u32[144,128]{1,0:T(1,128)}', space=vmem, size = 0x12000, scoped, tag = 'internal scratch']
  #allocation2 [shape = 'f32[16,16]{1,0:T(8,128)}', space=vmem, size = 0x2000, scoped, tag = 'scratch operand']
  #allocation3 [shape = 'f32[16,16]{1,0:T(8,128)}', space=vmem, size = 0x2000, scoped, tag = 'scratch operand']
  #allocation4 [shape = 'f32[22,22]{1,0:T(8,128)}', space=vmem, size = 0x3000, scoped, tag = 'scratch operand']
  #allocation5 [shape = 'f32[22,22]{1,0:T(8,128)}', space=vmem, size = 0x3000, scoped, tag = 'scratch operand']
  %s0 = inlined_call_operand.hbm [shape: f32[2,4,16,16], index: 0, kind: input, shape index: {}]
  %s1 = inlined_call_operand.vmem [shape: f32[2,49], index: 1, kind: input, shape index: {}]
  %s2 = inlined_call_operand.hbm [shape: f32[2,16,16], index: 2, kind: output, shape index: {}]
  %s3 = sld [smem:[#allocation0]]
  $region57: #{spatial_attention.1} parent=0
    _
  %s5 = ssub.s32 1, %s3
  %s6 = scalar_select 0, %s5, %s3
  $region1: #{spatial_attention.1} parent=0
    #allocation6 [shape = 'u8[65536]{0}', space=vmem, size = 0x10000, scoped, tag = 'input window, operand 0']
    #allocation7 [shape = 's32[2]{0}', space=sflag, size = 0x8, scoped, tag = 'scoped memory for spatial_attention.1']
    #allocation8 [shape = 's32[2]{0}', space=sflag, size = 0x8, scoped, tag = 'scoped memory for spatial_attention.1']
    #allocation9 [shape = 's32[2]{0}', space=sflag, size = 0x8, scoped, tag = 'scoped memory for spatial_attention.1']
    #allocation10 [shape = 'u8[1024]{0}', space=smem, size = 0x400, scoped, tag = 'input window, operand 1, single buffered']
    #allocation11 [shape = 'u8[16384]{0}', space=vmem, size = 0x4000, scoped, tag = 'output window, operand 0']
    %7 = vsyncpa [#allocation7], 0
    %s8 = scalar_lea.sflag [#allocation7], 1
    %9 = vsyncpa %s8, 0
    %10 = vsyncpa [#allocation9], 0
    %11 = vsyncpa [#allocation8], 0
    %s12 = scalar_lea.sflag [#allocation8], 1
    %13 = vsyncpa %s12, 0
    loop: start=0, step=1, limit=4
    $region2: #{spatial_attention.1} parent=1 // loop_pre_header
      _
    $region3: #{spatial_attention.1} parent=1 // loop_header
      %s15 = sphi 0, %s19
      %p16 = scmp.ge.s32.totalorder %s15, 4
      %s22 = sphi 0, %s34
      %s23 = sphi 0, %s30
      %s24 = sphi 0, %s22
      %s25 = sphi 0, %s23
      %s26 = sphi 0, %s24
      %s27 = sphi 0, %s25
      %s39 = sphi 0, %s41
      %s42 = sphi 0, %s39
      %s43 = sphi 0, %s42
      %s59 = sphi 0, %s43
      %s63 = sphi 0, %s63
      %s65 = sphi 0, %s63
      %s66 = sphi 0, %s65
      %s80 = sphi 0, %s66
      %s86 = sphi 0, %s88
      %s89 = sphi 0, %s86
      %s90 = sphi 0, %s89
      %s106 = sphi 0, %s90
    $region4: #{spatial_attention.1} parent=1 // loop_header_branch
      %18 = sbr.rel (%p16) target = $region8
    $region5: #{spatial_attention.1} parent=1 // loop_body
      %s20 = ssub.s32 %s15, 1
      %s21 = ssub.s32 %s15, 2
      %s28 = sadd.s32 1, %s23
      %p29 = scmp.ge.s32.totalorder %s28, 1
      %s30 = scalar_select %p29, 0, %s28
      %s31 = sadd.s32 1, %s22
      %s32 = scalar_select %p29, %s31, %s22
      %p33 = scmp.ge.s32.totalorder %s32, 2
      %s34 = scalar_select %p33, 0, %s32
      %s35 = ssub.s32 %s22, %s34
      %s36 = ssub.s32 %s23, %s30
      %s37 = sor.u32 %s35, %s36
      %p38 = scmp.eq.s32.totalorder %s37, 0
      %s40 = sadd.s32 %s39, 1
      %s41 = scalar_select %p38, %s39, %s40
      %p44 = pneg %p38
      %p45 = scmp.eq.s32.totalorder %s15, 1
      %p46 = por %p44, %p45
      %p47 = scmp.ne.s32.totalorder %s39, %s42
      %p48 = scmp.eq.s32.totalorder %s15, 0
      %p49 = por %p47, %p48
      %p50 = scmp.ne.s32.totalorder %s39, %s42
      %p51 = scmp.eq.s32.totalorder %s20, 1
      %p52 = por %p50, %p51
      %p53 = scmp.ne.s32.totalorder %s42, %s43
      %p54 = scmp.eq.s32.totalorder %s20, 0
      %p55 = por %p53, %p54
      %p56 = scmp.ne.s32.totalorder %s42, %s43
      %p57 = scmp.eq.s32.totalorder %s21, 1
      %p58 = por %p56, %p57
      %p60 = scmp.ne.s32.totalorder %s43, %s59
      %p61 = scmp.eq.s32.totalorder %s21, 0
      %p62 = por %p60, %p61
      %s64 = sadd.s32 %s63, 1
      %p67 = scmp.eq.s32.totalorder %s15, 1
      %p68 = scmp.ne.s32.totalorder %s63, %s65
      %p69 = scmp.eq.s32.totalorder %s15, 0
      %p70 = por %p68, %p69
      %p71 = scmp.ne.s32.totalorder %s63, %s65
      %p72 = scmp.eq.s32.totalorder %s20, 1
      %p73 = por %p71, %p72
      %p74 = scmp.ne.s32.totalorder %s65, %s66
      %p75 = scmp.eq.s32.totalorder %s20, 0
      %p76 = por %p74, %p75
      %p77 = scmp.ne.s32.totalorder %s65, %s66
      %p78 = scmp.eq.s32.totalorder %s21, 1
      %p79 = por %p77, %p78
      %p81 = scmp.ne.s32.totalorder %s66, %s80
      %p82 = scmp.eq.s32.totalorder %s21, 0
      %p83 = por %p81, %p82
      %s84 = ssub.s32 %s22, %s34
      %p85 = scmp.eq.s32.totalorder %s84, 0
      %s87 = sadd.s32 %s86, 1
      %s88 = scalar_select %p85, %s86, %s87
      %p91 = pneg %p85
      %p92 = scmp.eq.s32.totalorder %s15, 1
      %p93 = por %p91, %p92
      %p94 = scmp.ne.s32.totalorder %s86, %s89
      %p95 = scmp.eq.s32.totalorder %s15, 0
      %p96 = por %p94, %p95
      %p97 = scmp.ne.s32.totalorder %s86, %s89
      %p98 = scmp.eq.s32.totalorder %s20, 1
      %p99 = por %p97, %p98
      %p100 = scmp.ne.s32.totalorder %s89, %s90
      %p101 = scmp.eq.s32.totalorder %s20, 0
      %p102 = por %p100, %p101
      %p103 = scmp.ne.s32.totalorder %s89, %s90
      %p104 = scmp.eq.s32.totalorder %s21, 1
      %p105 = por %p103, %p104
      %p107 = scmp.ne.s32.totalorder %s90, %s106
      %p108 = scmp.eq.s32.totalorder %s21, 0
      %p109 = por %p107, %p108
      %p110 = scmp.le.s32.totalorder 1, %s15
      %p111 = scmp.lt.s32.totalorder %s15, 3
      %p112 = pnand %p110, %p111
      %p113 = pneg %p112
      // Predicated region
      $region9: #{spatial_attention.1} parent=5 // pred_check
        _
      $region10: #{spatial_attention.1} parent=5 // pred_check_branch
        %115 = sbr.rel (%p112) target = $region12
      $region11: #{spatial_attention.1} parent=5 // pred_region
        %s116 = ssub.s32 %s15, 1
        // Predicated region
        $region13: #{spatial_attention.1} parent=11 // pred_check
          %p117 = pneg %p76
        $region14: #{spatial_attention.1} parent=11 // pred_check_branch
          %119 = sbr.rel (%p117) target = $region16
        $region15: #{spatial_attention.1} parent=11 // pred_region
          %s121 = ssub.s32 32, 32
          %122 = vsyncadd [#allocation9], %s121
          %s124 = sshll.u32 %s1, 4
          %s125 = int_to_ptr.vmem [resolvable:$true] %s124
          %127 = dma.vmem_to_smem %s125, 32, [#allocation10], [#allocation9]
        $region16: #{spatial_attention.1} parent=11 // pred_fallthru
          _
      $region12: #{spatial_attention.1} parent=5 // pred_fallthru
        _
      %p128 = scmp.lt.s32.totalorder %s15, 2
      // Predicated region
      $region17: #{spatial_attention.1} parent=5 // pred_check
        %p129 = pneg %p128
      $region18: #{spatial_attention.1} parent=5 // pred_check_branch
        %131 = sbr.rel (%p129) target = $region20
      $region19: #{spatial_attention.1} parent=5 // pred_region
        // Predicated region
        $region21: #{spatial_attention.1} parent=19 // pred_check
          %p132 = pneg %p49
        $region22: #{spatial_attention.1} parent=19 // pred_check_branch
          %134 = sbr.rel (%p132) target = $region24
        $region23: #{spatial_attention.1} parent=19 // pred_region
          %s135 = sand.u32 %s39, 1
          %s136 = scalar_lea.sflag [#allocation7], %s135
          %s137 = sand.u32 %s39, 1
          %s138 = smul.addr %s137, 64
          %s139 = scalar_lea.vmem [#allocation6], %s138
          %s140 = smul.u32 4, %s23
          %s142 = ssub.s32 1024, 1024
          %143 = vsyncadd %s136, %s142
          %s144 = smul.addr %s140, 2
          %s145 = smul.addr %s22, 8
          %s146 = sadd.s32 %s144, %s145
          %s147 = smul.addr %s146, 128
          %s148 = scalar_lea.hbm %s0, %s147
          %s149 = sshll.u32 %s139, 4
          %s150 = int_to_ptr.vmem [resolvable:$true] %s149
          %155 = dma.hbm_to_vmem [thread:$0]  %s148, 1024, %s150, %s136, 128, 128, 8
        $region24: #{spatial_attention.1} parent=19 // pred_fallthru
          _
      $region20: #{spatial_attention.1} parent=5 // pred_fallthru
        _
      %p156 = scmp.le.s32.totalorder 1, %s15
      %p157 = scmp.lt.s32.totalorder %s15, 3
      %p158 = pnand %p156, %p157
      %p159 = pneg %p158
      // Predicated region
      $region25: #{spatial_attention.1} parent=5 // pred_check
        _
      $region26: #{spatial_attention.1} parent=5 // pred_check_branch
        %161 = sbr.rel (%p158) target = $region28
      $region27: #{spatial_attention.1} parent=5 // pred_region
        %s162 = ssub.s32 %s15, 1
        %s163 = sand.u32 %s42, 1
        %s164 = scalar_lea.sflag [#allocation7], %s163
        %s165 = sand.u32 %s42, 1
        %s166 = smul.addr %s165, 64
        %s167 = scalar_lea.vmem [#allocation6], %s166
        // Predicated region
        $region29: #{spatial_attention.1} parent=27 // pred_check
          %p168 = pneg %p55
        $region30: #{spatial_attention.1} parent=27 // pred_check_branch
          %170 = sbr.rel (%p168) target = $region32
        $region31: #{spatial_attention.1} parent=27 // pred_region
          %171 = dma.done %s164, 1024
        $region32: #{spatial_attention.1} parent=27 // pred_fallthru
          _
        // Predicated region
        $region33: #{spatial_attention.1} parent=27 // pred_check
          %p172 = pneg %p76
        $region34: #{spatial_attention.1} parent=27 // pred_check_branch
          %174 = sbr.rel (%p172) target = $region36
        $region35: #{spatial_attention.1} parent=27 // pred_region
          %175 = dma.done [#allocation9], 32
        $region36: #{spatial_attention.1} parent=27 // pred_fallthru
          _
        %176 = sfence
        %s177 = sand.u32 %s42, 1
        %s178 = scalar_lea.sflag [#allocation7], %s177
        %s179 = sand.u32 %s42, 1
        %s180 = smul.addr %s179, 64
        %s181 = scalar_lea.vmem [#allocation6], %s180
        %p182 = pneg %p55
        %p183 = pneg %p52
        %p184 = pneg %p76
        %p185 = pneg %p73
        %p186 = pneg %p102
        %p187 = pneg %p99
        %s188 = sand.u32 %s89, 1
        %s189 = scalar_lea.sflag [#allocation8], %s188
        %s190 = sand.u32 %s89, 1
        %s191 = smul.addr %s190, 16
        %s192 = scalar_lea.vmem [#allocation11], %s191
        %s193 = smul.u32 4, %s25
        %p194 = scmp.eq.s32.totalorder %s25, 0
        // Predicated region
        $region37: #{spatial_attention.1} parent=27 // pred_check
          %p195 = pneg %p194
        $region38: #{spatial_attention.1} parent=27 // pred_check_branch
          %197 = sbr.rel (%p195) target = $region40
        $region39: #{spatial_attention.1} parent=27 // pred_region
          %vm198 = vcmask 130048
          %199 = vst.msk [vmem:[#allocation2] sm:$0xff] %vm198, 0.0
          %200 = vst.msk [vmem:[#allocation2 + $0x8] sm:$0xff] %vm198, 0.0
          %201 = vst.msk [vmem:[#allocation3] sm:$0xff] %vm198, -inf
          %202 = vst.msk [vmem:[#allocation3 + $0x8] sm:$0xff] %vm198, -inf
        $region40: #{spatial_attention.1} parent=27 // pred_fallthru
          _
        %v203 = vld [vmem:[%s167] sm:$0xff]
        %v204 = vld [vmem:[%s167 + $0x8] sm:$0xff]
        %v205 = vadd.f32 %v203, 0.0
        %v206 = vadd.f32 %v204, 0.0
        %s207 = scalar_lea.vmem %s167, 16 [#allocation6]
        %v208 = vld [vmem:[%s207] sm:$0xff]
        %v209 = vld [vmem:[%s207 + $0x8] sm:$0xff]
        %v210 = vadd.f32 %v205, %v208
        %v211 = vadd.f32 %v206, %v209
        %v212 = vmax.f32 %v203, %v208
        %v213 = vmax.f32 %v204, %v209
        %s214 = scalar_lea.vmem %s167, 32 [#allocation6]
        %v215 = vld [vmem:[%s214] sm:$0xff]
        %v216 = vld [vmem:[%s214 + $0x8] sm:$0xff]
        %v217 = vadd.f32 %v210, %v215
        %v218 = vadd.f32 %v211, %v216
        %v219 = vmax.f32 %v212, %v215
        %v220 = vmax.f32 %v213, %v216
        %s221 = scalar_lea.vmem %s167, 48 [#allocation6]
        %v222 = vld [vmem:[%s221] sm:$0xff]
        %v223 = vld [vmem:[%s221 + $0x8] sm:$0xff]
        %v224 = vadd.f32 %v217, %v222
        %v225 = vadd.f32 %v218, %v223
        %v226 = vmax.f32 %v219, %v222
        %v227 = vmax.f32 %v220, %v223
        %v228 = vld [vmem:[#allocation2] sm:$0xff]
        %v229 = vld [vmem:[#allocation2 + $0x8] sm:$0xff]
        %v230 = vadd.f32 %v228, %v224
        %v231 = vadd.f32 %v229, %v225
        %vm232 = vcmask 130048
        %233 = vst.msk [vmem:[#allocation2] sm:$0xff] %vm232, %v230
        %234 = vst.msk [vmem:[#allocation2 + $0x8] sm:$0xff] %vm232, %v231
        %v235 = vld [vmem:[#allocation3] sm:$0xff]
        %v236 = vld [vmem:[#allocation3 + $0x8] sm:$0xff]
        %v237 = vmax.f32 %v235, %v226
        %v238 = vmax.f32 %v236, %v227
        %239 = vst.msk [vmem:[#allocation3] sm:$0xff] %vm232, %v237
        %240 = vst.msk [vmem:[#allocation3 + $0x8] sm:$0xff] %vm232, %v238
        // Predicated region
        $region41: #{spatial_attention.1} parent=27 // pred_check
          %p241 = pneg %p194
        $region42: #{spatial_attention.1} parent=27 // pred_check_branch
          %243 = sbr.rel (%p241) target = $region44
        $region43: #{spatial_attention.1} parent=27 // pred_region
          %vm244 = vcmask 179200
          %245 = vst.msk [vmem:[#allocation4] sm:$0xff] %vm244, 0.0
          %246 = vst.msk [vmem:[#allocation4 + $0x8] sm:$0xff] %vm244, 0.0
          %vm247 = vcmask 177152
          %248 = vst.msk [vmem:[#allocation4 + $0x10] sm:$0x3f] %vm247, 0.0
          %249 = vst.msk [vmem:[#allocation5] sm:$0xff] %vm244, 0.0
          %250 = vst.msk [vmem:[#allocation5 + $0x8] sm:$0xff] %vm244, 0.0
          %251 = vst.msk [vmem:[#allocation5 + $0x10] sm:$0x3f] %vm247, 0.0
          %v252 = vld [vmem:[#allocation2] sm:$0xff]
          %v253 = vld [vmem:[#allocation2 + $0x8] sm:$0xff]
          %v254 = vmul.f32 %v252, 0.25
          %v255 = vmul.f32 %v253, 0.25
          %258 = vrot.lane.b32.xlu0 %v254, 3
          %v259 = vpop.permute.xlu0 %258
          %260 = vrot.lane.b32.xlu0 %v255, 3
          %v261 = vpop.permute.xlu0 %260
          %vm264 = vcmask 154648
          %265 = vst.msk [vmem:[#allocation4 + $0x3] sm:$0xff] %vm264, %v259
          %266 = vst.msk [vmem:[#allocation4 + $0xb] sm:$0xff] %vm264, %v261
          %v267 = vld [vmem:[#allocation3] sm:$0xff]
          %v268 = vld [vmem:[#allocation3 + $0x8] sm:$0xff]
          %271 = vrot.lane.b32.xlu0 %v267, 3
          %v272 = vpop.permute.xlu0 %271
          %273 = vrot.lane.b32.xlu0 %v268, 3
          %v274 = vpop.permute.xlu0 %273
          %277 = vst.msk [vmem:[#allocation5 + $0x3] sm:$0xff] %vm264, %v272
          %278 = vst.msk [vmem:[#allocation5 + $0xb] sm:$0xff] %vm264, %v274
          %s279 = sld [smem:[#allocation10]]
          %v280 = vld [vmem:[#allocation4] sm:$0xff]
          %v281 = vld [vmem:[#allocation4 + $0x8] sm:$0xff]
          %v282 = vstv %s279
          %v283 = vmul.f32 %v282, %v280
          %v284 = vmul.f32 %v282, %v281
          %s285 = sld [smem:[#allocation10 + $0x80]]
          %v286 = vld [vmem:[#allocation5] sm:$0xff]
          %v287 = vld [vmem:[#allocation5 + $0x8] sm:$0xff]
          %v288 = vstv %s285
          %v289 = vmul.f32 %v288, %v286
          %v290 = vmul.f32 %v288, %v287
          %v291 = vadd.f32 %v283, %v289
          %v292 = vadd.f32 %v284, %v290
          %v293 = vadd.f32 %v291, 0.0
          %v294 = vadd.f32 %v292, 0.0
          %s295 = sld [smem:[#allocation10 + $0x1]]
          %v296 = vstv %s295
          %v297 = vmul.f32 %v296, %v280
          %v298 = vmul.f32 %v296, %v281
          %s299 = sld [smem:[#allocation10 + $0x81]]
          %v300 = vstv %s299
          %v301 = vmul.f32 %v300, %v286
          %v302 = vmul.f32 %v300, %v287
          %v303 = vadd.f32 %v297, %v301
          %v304 = vadd.f32 %v298, %v302
          %307 = vrot.lane.b32.xlu0 %v303, 127
          %v308 = vpop.permute.xlu0 %307
          %309 = vrot.lane.b32.xlu0 %v304, 127
          %v310 = vpop.permute.xlu0 %309
          %v313 = vadd.f32 %v293, %v308
          %v314 = vadd.f32 %v294, %v310
          %s315 = sld [smem:[#allocation10 + $0x2]]
          %v316 = vstv %s315
          %v317 = vmul.f32 %v316, %v280
          %v318 = vmul.f32 %v316, %v281
          %s319 = sld [smem:[#allocation10 + $0x82]]
          %v320 = vstv %s319
          %v321 = vmul.f32 %v320, %v286
          %v322 = vmul.f32 %v320, %v287
          %v323 = vadd.f32 %v317, %v321
          %v324 = vadd.f32 %v318, %v322
          %327 = vrot.lane.b32.xlu0 %v323, 126
          %v328 = vpop.permute.xlu0 %327
          %329 = vrot.lane.b32.xlu0 %v324, 126
          %v330 = vpop.permute.xlu0 %329
          %v333 = vadd.f32 %v313, %v328
          %v334 = vadd.f32 %v314, %v330
          %s335 = sld [smem:[#allocation10 + $0x3]]
          %v336 = vstv %s335
          %v337 = vmul.f32 %v336, %v280
          %v338 = vmul.f32 %v336, %v281
          %s339 = sld [smem:[#allocation10 + $0x83]]
          %v340 = vstv %s339
          %v341 = vmul.f32 %v340, %v286
          %v342 = vmul.f32 %v340, %v287
          %v343 = vadd.f32 %v337, %v341
          %v344 = vadd.f32 %v338, %v342
          %347 = vrot.lane.b32.xlu0 %v343, 125
          %v348 = vpop.permute.xlu0 %347
          %349 = vrot.lane.b32.xlu0 %v344, 125
          %v350 = vpop.permute.xlu0 %349
          %v353 = vadd.f32 %v333, %v348
          %v354 = vadd.f32 %v334, %v350
          %s355 = sld [smem:[#allocation10 + $0x4]]
          %v356 = vstv %s355
          %v357 = vmul.f32 %v356, %v280
          %v358 = vmul.f32 %v356, %v281
          %s359 = sld [smem:[#allocation10 + $0x84]]
          %v360 = vstv %s359
          %v361 = vmul.f32 %v360, %v286
          %v362 = vmul.f32 %v360, %v287
          %v363 = vadd.f32 %v357, %v361
          %v364 = vadd.f32 %v358, %v362
          %367 = vrot.lane.b32.xlu0 %v363, 124
          %v368 = vpop.permute.xlu0 %367
          %369 = vrot.lane.b32.xlu0 %v364, 124
          %v370 = vpop.permute.xlu0 %369
          %v373 = vadd.f32 %v353, %v368
          %v374 = vadd.f32 %v354, %v370
          %s375 = sld [smem:[#allocation10 + $0x5]]
          %v376 = vstv %s375
          %v377 = vmul.f32 %v376, %v280
          %v378 = vmul.f32 %v376, %v281
          %s379 = sld [smem:[#allocation10 + $0x85]]
          %v380 = vstv %s379
          %v381 = vmul.f32 %v380, %v286
          %v382 = vmul.f32 %v380, %v287
          %v383 = vadd.f32 %v377, %v381
          %v384 = vadd.f32 %v378, %v382
          %387 = vrot.lane.b32.xlu0 %v383, 123
          %v388 = vpop.permute.xlu0 %387
          %389 = vrot.lane.b32.xlu0 %v384, 123
          %v390 = vpop.permute.xlu0 %389
          %v393 = vadd.f32 %v373, %v388
          %v394 = vadd.f32 %v374, %v390
          %s395 = sld [smem:[#allocation10 + $0x6]]
          %v396 = vstv %s395
          %v397 = vmul.f32 %v396, %v280
          %v398 = vmul.f32 %v396, %v281
          %s399 = sld [smem:[#allocation10 + $0x86]]
          %v400 = vstv %s399
          %v401 = vmul.f32 %v400, %v286
          %v402 = vmul.f32 %v400, %v287
          %v403 = vadd.f32 %v397, %v401
          %v404 = vadd.f32 %v398, %v402
          %407 = vrot.lane.b32.xlu0 %v403, 122
          %v408 = vpop.permute.xlu0 %407
          %409 = vrot.lane.b32.xlu0 %v404, 122
          %v410 = vpop.permute.xlu0 %409
          %v413 = vadd.f32 %v393, %v408
          %v414 = vadd.f32 %v394, %v410
          %s415 = sld [smem:[#allocation10 + $0x7]]
          %v416 = vld [vmem:[#allocation4 + $0x1] sm:$0xff]
          %v417 = vld [vmem:[#allocation4 + $0x9] sm:$0xff]
          %v418 = vstv %s415
          %v419 = vmul.f32 %v418, %v416
          %v420 = vmul.f32 %v418, %v417
          %s421 = sld [smem:[#allocation10 + $0x87]]
          %v422 = vld [vmem:[#allocation5 + $0x1] sm:$0xff]
          %v423 = vld [vmem:[#allocation5 + $0x9] sm:$0xff]
          %v424 = vstv %s421
          %v425 = vmul.f32 %v424, %v422
          %v426 = vmul.f32 %v424, %v423
          %v427 = vadd.f32 %v419, %v425
          %v428 = vadd.f32 %v420, %v426
          %v429 = vadd.f32 %v413, %v427
          %v430 = vadd.f32 %v414, %v428
          %s431 = sld [smem:[#allocation10 + $0x8]]
          %v432 = vstv %s431
          %v433 = vmul.f32 %v432, %v416
          %v434 = vmul.f32 %v432, %v417
          %s435 = sld [smem:[#allocation10 + $0x88]]
          %v436 = vstv %s435
          %v437 = vmul.f32 %v436, %v422
          %v438 = vmul.f32 %v436, %v423
          %v439 = vadd.f32 %v433, %v437
          %v440 = vadd.f32 %v434, %v438
          %443 = vrot.lane.b32.xlu0 %v439, 127
          %v444 = vpop.permute.xlu0 %443
          %445 = vrot.lane.b32.xlu0 %v440, 127
          %v446 = vpop.permute.xlu0 %445
          %v449 = vadd.f32 %v429, %v444
          %v450 = vadd.f32 %v430, %v446
          %s451 = sld [smem:[#allocation10 + $0x9]]
          %v452 = vstv %s451
          %v453 = vmul.f32 %v452, %v416
          %v454 = vmul.f32 %v452, %v417
          %s455 = sld [smem:[#allocation10 + $0x89]]
          %v456 = vstv %s455
          %v457 = vmul.f32 %v456, %v422
          %v458 = vmul.f32 %v456, %v423
          %v459 = vadd.f32 %v453, %v457
          %v460 = vadd.f32 %v454, %v458
          %463 = vrot.lane.b32.xlu0 %v459, 126
          %v464 = vpop.permute.xlu0 %463
          %465 = vrot.lane.b32.xlu0 %v460, 126
          %v466 = vpop.permute.xlu0 %465
          %v469 = vadd.f32 %v449, %v464
          %v470 = vadd.f32 %v450, %v466
          %s471 = sld [smem:[#allocation10 + $0xa]]
          %v472 = vstv %s471
          %v473 = vmul.f32 %v472, %v416
          %v474 = vmul.f32 %v472, %v417
          %s475 = sld [smem:[#allocation10 + $0x8a]]
          %v476 = vstv %s475
          %v477 = vmul.f32 %v476, %v422
          %v478 = vmul.f32 %v476, %v423
          %v479 = vadd.f32 %v473, %v477
          %v480 = vadd.f32 %v474, %v478
          %483 = vrot.lane.b32.xlu0 %v479, 125
          %v484 = vpop.permute.xlu0 %483
          %485 = vrot.lane.b32.xlu0 %v480, 125
          %v486 = vpop.permute.xlu0 %485
          %v489 = vadd.f32 %v469, %v484
          %v490 = vadd.f32 %v470, %v486
          %s491 = sld [smem:[#allocation10 + $0xb]]
          %v492 = vstv %s491
          %v493 = vmul.f32 %v492, %v416
          %v494 = vmul.f32 %v492, %v417
          %s495 = sld [smem:[#allocation10 + $0x8b]]
          %v496 = vstv %s495
          %v497 = vmul.f32 %v496, %v422
          %v498 = vmul.f32 %v496, %v423
          %v499 = vadd.f32 %v493, %v497
          %v500 = vadd.f32 %v494, %v498
          %503 = vrot.lane.b32.xlu0 %v499, 124
          %v504 = vpop.permute.xlu0 %503
          %505 = vrot.lane.b32.xlu0 %v500, 124
          %v506 = vpop.permute.xlu0 %505
          %v509 = vadd.f32 %v489, %v504
          %v510 = vadd.f32 %v490, %v506
          %s511 = sld [smem:[#allocation10 + $0xc]]
          %v512 = vstv %s511
          %v513 = vmul.f32 %v512, %v416
          %v514 = vmul.f32 %v512, %v417
          %s515 = sld [smem:[#allocation10 + $0x8c]]
          %v516 = vstv %s515
          %v517 = vmul.f32 %v516, %v422
          %v518 = vmul.f32 %v516, %v423
          %v519 = vadd.f32 %v513, %v517
          %v520 = vadd.f32 %v514, %v518
          %523 = vrot.lane.b32.xlu0 %v519, 123
          %v524 = vpop.permute.xlu0 %523
          %525 = vrot.lane.b32.xlu0 %v520, 123
          %v526 = vpop.permute.xlu0 %525
          %v529 = vadd.f32 %v509, %v524
          %v530 = vadd.f32 %v510, %v526
          %s531 = sld [smem:[#allocation10 + $0xd]]
          %v532 = vstv %s531
          %v533 = vmul.f32 %v532, %v416
          %v534 = vmul.f32 %v532, %v417
          %s535 = sld [smem:[#allocation10 + $0x8d]]
          %v536 = vstv %s535
          %v537 = vmul.f32 %v536, %v422
          %v538 = vmul.f32 %v536, %v423
          %v539 = vadd.f32 %v533, %v537
          %v540 = vadd.f32 %v534, %v538
          %543 = vrot.lane.b32.xlu0 %v539, 122
          %v544 = vpop.permute.xlu0 %543
          %545 = vrot.lane.b32.xlu0 %v540, 122
          %v546 = vpop.permute.xlu0 %545
          %v549 = vadd.f32 %v529, %v544
          %v550 = vadd.f32 %v530, %v546
          %s551 = sld [smem:[#allocation10 + $0xe]]
          %v552 = vld [vmem:[#allocation4 + $0x2] sm:$0xff]
          %v553 = vld [vmem:[#allocation4 + $0xa] sm:$0xff]
          %v554 = vstv %s551
          %v555 = vmul.f32 %v554, %v552
          %v556 = vmul.f32 %v554, %v553
          %s557 = sld [smem:[#allocation10 + $0x8e]]
          %v558 = vld [vmem:[#allocation5 + $0x2] sm:$0xff]
          %v559 = vld [vmem:[#allocation5 + $0xa] sm:$0xff]
          %v560 = vstv %s557
          %v561 = vmul.f32 %v560, %v558
          %v562 = vmul.f32 %v560, %v559
          %v563 = vadd.f32 %v555, %v561
          %v564 = vadd.f32 %v556, %v562
          %v565 = vadd.f32 %v549, %v563
          %v566 = vadd.f32 %v550, %v564
          %s567 = sld [smem:[#allocation10 + $0xf]]
          %v568 = vstv %s567
          %v569 = vmul.f32 %v568, %v552
          %v570 = vmul.f32 %v568, %v553
          %s571 = sld [smem:[#allocation10 + $0x8f]]
          %v572 = vstv %s571
          %v573 = vmul.f32 %v572, %v558
          %v574 = vmul.f32 %v572, %v559
          %v575 = vadd.f32 %v569, %v573
          %v576 = vadd.f32 %v570, %v574
          %579 = vrot.lane.b32.xlu0 %v575, 127
          %v580 = vpop.permute.xlu0 %579
          %581 = vrot.lane.b32.xlu0 %v576, 127
          %v582 = vpop.permute.xlu0 %581
          %v585 = vadd.f32 %v565, %v580
          %v586 = vadd.f32 %v566, %v582
          %s587 = sld [smem:[#allocation10 + $0x10]]
          %v588 = vstv %s587
          %v589 = vmul.f32 %v588, %v552
          %v590 = vmul.f32 %v588, %v553
          %s591 = sld [smem:[#allocation10 + $0x90]]
          %v592 = vstv %s591
          %v593 = vmul.f32 %v592, %v558
          %v594 = vmul.f32 %v592, %v559
          %v595 = vadd.f32 %v589, %v593
          %v596 = vadd.f32 %v590, %v594
          %599 = vrot.lane.b32.xlu0 %v595, 126
          %v600 = vpop.permute.xlu0 %599
          %601 = vrot.lane.b32.xlu0 %v596, 126
          %v602 = vpop.permute.xlu0 %601
          %v605 = vadd.f32 %v585, %v600
          %v606 = vadd.f32 %v586, %v602
          %s607 = sld [smem:[#allocation10 + $0x11]]
          %v608 = vstv %s607
          %v609 = vmul.f32 %v608, %v552
          %v610 = vmul.f32 %v608, %v553
          %s611 = sld [smem:[#allocation10 + $0x91]]
          %v612 = vstv %s611
          %v613 = vmul.f32 %v612, %v558
          %v614 = vmul.f32 %v612, %v559
          %v615 = vadd.f32 %v609, %v613
          %v616 = vadd.f32 %v610, %v614
          %619 = vrot.lane.b32.xlu0 %v615, 125
          %v620 = vpop.permute.xlu0 %619
          %621 = vrot.lane.b32.xlu0 %v616, 125
          %v622 = vpop.permute.xlu0 %621
          %v625 = vadd.f32 %v605, %v620
          %v626 = vadd.f32 %v606, %v622
          %s627 = sld [smem:[#allocation10 + $0x12]]
          %v628 = vstv %s627
          %v629 = vmul.f32 %v628, %v552
          %v630 = vmul.f32 %v628, %v553
          %s631 = sld [smem:[#allocation10 + $0x92]]
          %v632 = vstv %s631
          %v633 = vmul.f32 %v632, %v558
          %v634 = vmul.f32 %v632, %v559
          %v635 = vadd.f32 %v629, %v633
          %v636 = vadd.f32 %v630, %v634
          %639 = vrot.lane.b32.xlu0 %v635, 124
          %v640 = vpop.permute.xlu0 %639
          %641 = vrot.lane.b32.xlu0 %v636, 124
          %v642 = vpop.permute.xlu0 %641
          %v645 = vadd.f32 %v625, %v640
          %v646 = vadd.f32 %v626, %v642
          %s647 = sld [smem:[#allocation10 + $0x13]]
          %v648 = vstv %s647
          %v649 = vmul.f32 %v648, %v552
          %v650 = vmul.f32 %v648, %v553
          %s651 = sld [smem:[#allocation10 + $0x93]]
          %v652 = vstv %s651
          %v653 = vmul.f32 %v652, %v558
          %v654 = vmul.f32 %v652, %v559
          %v655 = vadd.f32 %v649, %v653
          %v656 = vadd.f32 %v650, %v654
          %659 = vrot.lane.b32.xlu0 %v655, 123
          %v660 = vpop.permute.xlu0 %659
          %661 = vrot.lane.b32.xlu0 %v656, 123
          %v662 = vpop.permute.xlu0 %661
          %v665 = vadd.f32 %v645, %v660
          %v666 = vadd.f32 %v646, %v662
          %s667 = sld [smem:[#allocation10 + $0x14]]
          %v668 = vstv %s667
          %v669 = vmul.f32 %v668, %v552
          %v670 = vmul.f32 %v668, %v553
          %s671 = sld [smem:[#allocation10 + $0x94]]
          %v672 = vstv %s671
          %v673 = vmul.f32 %v672, %v558
          %v674 = vmul.f32 %v672, %v559
          %v675 = vadd.f32 %v669, %v673
          %v676 = vadd.f32 %v670, %v674
          %679 = vrot.lane.b32.xlu0 %v675, 122
          %v680 = vpop.permute.xlu0 %679
          %681 = vrot.lane.b32.xlu0 %v676, 122
          %v682 = vpop.permute.xlu0 %681
          %v685 = vadd.f32 %v665, %v680
          %v686 = vadd.f32 %v666, %v682
          %s687 = sld [smem:[#allocation10 + $0x15]]
          %v688 = vld [vmem:[#allocation4 + $0x3] sm:$0xff]
          %v689 = vld [vmem:[#allocation4 + $0xb] sm:$0xff]
          %v690 = vstv %s687
          %v691 = vmul.f32 %v690, %v688
          %v692 = vmul.f32 %v690, %v689
          %s693 = sld [smem:[#allocation10 + $0x95]]
          %v694 = vld [vmem:[#allocation5 + $0x3] sm:$0xff]
          %v695 = vld [vmem:[#allocation5 + $0xb] sm:$0xff]
          %v696 = vstv %s693
          %v697 = vmul.f32 %v696, %v694
          %v698 = vmul.f32 %v696, %v695
          %v699 = vadd.f32 %v691, %v697
          %v700 = vadd.f32 %v692, %v698
          %v701 = vadd.f32 %v685, %v699
          %v702 = vadd.f32 %v686, %v700
          %s703 = sld [smem:[#allocation10 + $0x16]]
          %v704 = vstv %s703
          %v705 = vmul.f32 %v704, %v688
          %v706 = vmul.f32 %v704, %v689
          %s707 = sld [smem:[#allocation10 + $0x96]]
          %v708 = vstv %s707
          %v709 = vmul.f32 %v708, %v694
          %v710 = vmul.f32 %v708, %v695
          %v711 = vadd.f32 %v705, %v709
          %v712 = vadd.f32 %v706, %v710
          %715 = vrot.lane.b32.xlu0 %v711, 127
          %v716 = vpop.permute.xlu0 %715
          %717 = vrot.lane.b32.xlu0 %v712, 127
          %v718 = vpop.permute.xlu0 %717
          %v721 = vadd.f32 %v701, %v716
          %v722 = vadd.f32 %v702, %v718
          %s723 = sld [smem:[#allocation10 + $0x17]]
          %v724 = vstv %s723
          %v725 = vmul.f32 %v724, %v688
          %v726 = vmul.f32 %v724, %v689
          %s727 = sld [smem:[#allocation10 + $0x97]]
          %v728 = vstv %s727
          %v729 = vmul.f32 %v728, %v694
          %v730 = vmul.f32 %v728, %v695
          %v731 = vadd.f32 %v725, %v729
          %v732 = vadd.f32 %v726, %v730
          %735 = vrot.lane.b32.xlu0 %v731, 126
          %v736 = vpop.permute.xlu0 %735
          %737 = vrot.lane.b32.xlu0 %v732, 126
          %v738 = vpop.permute.xlu0 %737
          %v741 = vadd.f32 %v721, %v736
          %v742 = vadd.f32 %v722, %v738
          %s743 = sld [smem:[#allocation10 + $0x18]]
          %v744 = vstv %s743
          %v745 = vmul.f32 %v744, %v688
          %v746 = vmul.f32 %v744, %v689
          %s747 = sld [smem:[#allocation10 + $0x98]]
          %v748 = vstv %s747
          %v749 = vmul.f32 %v748, %v694
          %v750 = vmul.f32 %v748, %v695
          %v751 = vadd.f32 %v745, %v749
          %v752 = vadd.f32 %v746, %v750
          %755 = vrot.lane.b32.xlu0 %v751, 125
          %v756 = vpop.permute.xlu0 %755
          %757 = vrot.lane.b32.xlu0 %v752, 125
          %v758 = vpop.permute.xlu0 %757
          %v761 = vadd.f32 %v741, %v756
          %v762 = vadd.f32 %v742, %v758
          %s763 = sld [smem:[#allocation10 + $0x19]]
          %v764 = vstv %s763
          %v765 = vmul.f32 %v764, %v688
          %v766 = vmul.f32 %v764, %v689
          %s767 = sld [smem:[#allocation10 + $0x99]]
          %v768 = vstv %s767
          %v769 = vmul.f32 %v768, %v694
          %v770 = vmul.f32 %v768, %v695
          %v771 = vadd.f32 %v765, %v769
          %v772 = vadd.f32 %v766, %v770
          %775 = vrot.lane.b32.xlu0 %v771, 124
          %v776 = vpop.permute.xlu0 %775
          %777 = vrot.lane.b32.xlu0 %v772, 124
          %v778 = vpop.permute.xlu0 %777
          %v781 = vadd.f32 %v761, %v776
          %v782 = vadd.f32 %v762, %v778
          %s783 = sld [smem:[#allocation10 + $0x1a]]
          %v784 = vstv %s783
          %v785 = vmul.f32 %v784, %v688
          %v786 = vmul.f32 %v784, %v689
          %s787 = sld [smem:[#allocation10 + $0x9a]]
          %v788 = vstv %s787
          %v789 = vmul.f32 %v788, %v694
          %v790 = vmul.f32 %v788, %v695
          %v791 = vadd.f32 %v785, %v789
          %v792 = vadd.f32 %v786, %v790
          %795 = vrot.lane.b32.xlu0 %v791, 123
          %v796 = vpop.permute.xlu0 %795
          %797 = vrot.lane.b32.xlu0 %v792, 123
          %v798 = vpop.permute.xlu0 %797
          %v801 = vadd.f32 %v781, %v796
          %v802 = vadd.f32 %v782, %v798
          %s803 = sld [smem:[#allocation10 + $0x1b]]
          %v804 = vstv %s803
          %v805 = vmul.f32 %v804, %v688
          %v806 = vmul.f32 %v804, %v689
          %s807 = sld [smem:[#allocation10 + $0x9b]]
          %v808 = vstv %s807
          %v809 = vmul.f32 %v808, %v694
          %v810 = vmul.f32 %v808, %v695
          %v811 = vadd.f32 %v805, %v809
          %v812 = vadd.f32 %v806, %v810
          %815 = vrot.lane.b32.xlu0 %v811, 122
          %v816 = vpop.permute.xlu0 %815
          %817 = vrot.lane.b32.xlu0 %v812, 122
          %v818 = vpop.permute.xlu0 %817
          %v821 = vadd.f32 %v801, %v816
          %v822 = vadd.f32 %v802, %v818
          %s823 = sld [smem:[#allocation10 + $0x1c]]
          %v824 = vld [vmem:[#allocation4 + $0x4] sm:$0xff]
          %v825 = vld [vmem:[#allocation4 + $0xc] sm:$0xff]
          %v826 = vstv %s823
          %v827 = vmul.f32 %v826, %v824
          %v828 = vmul.f32 %v826, %v825
          %s829 = sld [smem:[#allocation10 + $0x9c]]
          %v830 = vld [vmem:[#allocation5 + $0x4] sm:$0xff]
          %v831 = vld [vmem:[#allocation5 + $0xc] sm:$0xff]
          %v832 = vstv %s829
          %v833 = vmul.f32 %v832, %v830
          %v834 = vmul.f32 %v832, %v831
          %v835 = vadd.f32 %v827, %v833
          %v836 = vadd.f32 %v828, %v834
          %v837 = vadd.f32 %v821, %v835
          %v838 = vadd.f32 %v822, %v836
          %s839 = sld [smem:[#allocation10 + $0x1d]]
          %v840 = vstv %s839
          %v841 = vmul.f32 %v840, %v824
          %v842 = vmul.f32 %v840, %v825
          %s843 = sld [smem:[#allocation10 + $0x9d]]
          %v844 = vstv %s843
          %v845 = vmul.f32 %v844, %v830
          %v846 = vmul.f32 %v844, %v831
          %v847 = vadd.f32 %v841, %v845
          %v848 = vadd.f32 %v842, %v846
          %851 = vrot.lane.b32.xlu0 %v847, 127
          %v852 = vpop.permute.xlu0 %851
          %853 = vrot.lane.b32.xlu0 %v848, 127
          %v854 = vpop.permute.xlu0 %853
          %v857 = vadd.f32 %v837, %v852
          %v858 = vadd.f32 %v838, %v854
          %s859 = sld [smem:[#allocation10 + $0x1e]]
          %v860 = vstv %s859
          %v861 = vmul.f32 %v860, %v824
          %v862 = vmul.f32 %v860, %v825
          %s863 = sld [smem:[#allocation10 + $0x9e]]
          %v864 = vstv %s863
          %v865 = vmul.f32 %v864, %v830
          %v866 = vmul.f32 %v864, %v831
          %v867 = vadd.f32 %v861, %v865
          %v868 = vadd.f32 %v862, %v866
          %871 = vrot.lane.b32.xlu0 %v867, 126
          %v872 = vpop.permute.xlu0 %871
          %873 = vrot.lane.b32.xlu0 %v868, 126
          %v874 = vpop.permute.xlu0 %873
          %v877 = vadd.f32 %v857, %v872
          %v878 = vadd.f32 %v858, %v874
          %s879 = sld [smem:[#allocation10 + $0x1f]]
          %v880 = vstv %s879
          %v881 = vmul.f32 %v880, %v824
          %v882 = vmul.f32 %v880, %v825
          %s883 = sld [smem:[#allocation10 + $0x9f]]
          %v884 = vstv %s883
          %v885 = vmul.f32 %v884, %v830
          %v886 = vmul.f32 %v884, %v831
          %v887 = vadd.f32 %v881, %v885
          %v888 = vadd.f32 %v882, %v886
          %891 = vrot.lane.b32.xlu0 %v887, 125
          %v892 = vpop.permute.xlu0 %891
          %893 = vrot.lane.b32.xlu0 %v888, 125
          %v894 = vpop.permute.xlu0 %893
          %v897 = vadd.f32 %v877, %v892
          %v898 = vadd.f32 %v878, %v894
          %s899 = sld [smem:[#allocation10 + $0x20]]
          %v900 = vstv %s899
          %v901 = vmul.f32 %v900, %v824
          %v902 = vmul.f32 %v900, %v825
          %s903 = sld [smem:[#allocation10 + $0xa0]]
          %v904 = vstv %s903
          %v905 = vmul.f32 %v904, %v830
          %v906 = vmul.f32 %v904, %v831
          %v907 = vadd.f32 %v901, %v905
          %v908 = vadd.f32 %v902, %v906
          %911 = vrot.lane.b32.xlu0 %v907, 124
          %v912 = vpop.permute.xlu0 %911
          %913 = vrot.lane.b32.xlu0 %v908, 124
          %v914 = vpop.permute.xlu0 %913
          %v917 = vadd.f32 %v897, %v912
          %v918 = vadd.f32 %v898, %v914
          %s919 = sld [smem:[#allocation10 + $0x21]]
          %v920 = vstv %s919
          %v921 = vmul.f32 %v920, %v824
          %v922 = vmul.f32 %v920, %v825
          %s923 = sld [smem:[#allocation10 + $0xa1]]
          %v924 = vstv %s923
          %v925 = vmul.f32 %v924, %v830
          %v926 = vmul.f32 %v924, %v831
          %v927 = vadd.f32 %v921, %v925
          %v928 = vadd.f32 %v922, %v926
          %931 = vrot.lane.b32.xlu0 %v927, 123
          %v932 = vpop.permute.xlu0 %931
          %933 = vrot.lane.b32.xlu0 %v928, 123
          %v934 = vpop.permute.xlu0 %933
          %v937 = vadd.f32 %v917, %v932
          %v938 = vadd.f32 %v918, %v934
          %s939 = sld [smem:[#allocation10 + $0x22]]
          %v940 = vstv %s939
          %v941 = vmul.f32 %v940, %v824
          %v942 = vmul.f32 %v940, %v825
          %s943 = sld [smem:[#allocation10 + $0xa2]]
          %v944 = vstv %s943
          %v945 = vmul.f32 %v944, %v830
          %v946 = vmul.f32 %v944, %v831
          %v947 = vadd.f32 %v941, %v945
          %v948 = vadd.f32 %v942, %v946
          %951 = vrot.lane.b32.xlu0 %v947, 122
          %v952 = vpop.permute.xlu0 %951
          %953 = vrot.lane.b32.xlu0 %v948, 122
          %v954 = vpop.permute.xlu0 %953
          %v957 = vadd.f32 %v937, %v952
          %v958 = vadd.f32 %v938, %v954
          %s959 = sld [smem:[#allocation10 + $0x23]]
          %v960 = vld [vmem:[#allocation4 + $0x5] sm:$0xff]
          %v961 = vld [vmem:[#allocation4 + $0xd] sm:$0xff]
          %v962 = vstv %s959
          %v963 = vmul.f32 %v962, %v960
          %v964 = vmul.f32 %v962, %v961
          %s965 = sld [smem:[#allocation10 + $0xa3]]
          %v966 = vld [vmem:[#allocation5 + $0x5] sm:$0xff]
          %v967 = vld [vmem:[#allocation5 + $0xd] sm:$0xff]
          %v968 = vstv %s965
          %v969 = vmul.f32 %v968, %v966
          %v970 = vmul.f32 %v968, %v967
          %v971 = vadd.f32 %v963, %v969
          %v972 = vadd.f32 %v964, %v970
          %v973 = vadd.f32 %v957, %v971
          %v974 = vadd.f32 %v958, %v972
          %s975 = sld [smem:[#allocation10 + $0x24]]
          %v976 = vstv %s975
          %v977 = vmul.f32 %v976, %v960
          %v978 = vmul.f32 %v976, %v961
          %s979 = sld [smem:[#allocation10 + $0xa4]]
          %v980 = vstv %s979
          %v981 = vmul.f32 %v980, %v966
          %v982 = vmul.f32 %v980, %v967
          %v983 = vadd.f32 %v977, %v981
          %v984 = vadd.f32 %v978, %v982
          %987 = vrot.lane.b32.xlu0 %v983, 127
          %v988 = vpop.permute.xlu0 %987
          %989 = vrot.lane.b32.xlu0 %v984, 127
          %v990 = vpop.permute.xlu0 %989
          %v993 = vadd.f32 %v973, %v988
          %v994 = vadd.f32 %v974, %v990
          %s995 = sld [smem:[#allocation10 + $0x25]]
          %v996 = vstv %s995
          %v997 = vmul.f32 %v996, %v960
          %v998 = vmul.f32 %v996, %v961
          %s999 = sld [smem:[#allocation10 + $0xa5]]
          %v1000 = vstv %s999
          %v1001 = vmul.f32 %v1000, %v966
          %v1002 = vmul.f32 %v1000, %v967
          %v1003 = vadd.f32 %v997, %v1001
          %v1004 = vadd.f32 %v998, %v1002
          %1007 = vrot.lane.b32.xlu0 %v1003, 126
          %v1008 = vpop.permute.xlu0 %1007
          %1009 = vrot.lane.b32.xlu0 %v1004, 126
          %v1010 = vpop.permute.xlu0 %1009
          %v1013 = vadd.f32 %v993, %v1008
          %v1014 = vadd.f32 %v994, %v1010
          %s1015 = sld [smem:[#allocation10 + $0x26]]
          %v1016 = vstv %s1015
          %v1017 = vmul.f32 %v1016, %v960
          %v1018 = vmul.f32 %v1016, %v961
          %s1019 = sld [smem:[#allocation10 + $0xa6]]
          %v1020 = vstv %s1019
          %v1021 = vmul.f32 %v1020, %v966
          %v1022 = vmul.f32 %v1020, %v967
          %v1023 = vadd.f32 %v1017, %v1021
          %v1024 = vadd.f32 %v1018, %v1022
          %1027 = vrot.lane.b32.xlu0 %v1023, 125
          %v1028 = vpop.permute.xlu0 %1027
          %1029 = vrot.lane.b32.xlu0 %v1024, 125
          %v1030 = vpop.permute.xlu0 %1029
          %v1033 = vadd.f32 %v1013, %v1028
          %v1034 = vadd.f32 %v1014, %v1030
          %s1035 = sld [smem:[#allocation10 + $0x27]]
          %v1036 = vstv %s1035
          %v1037 = vmul.f32 %v1036, %v960
          %v1038 = vmul.f32 %v1036, %v961
          %s1039 = sld [smem:[#allocation10 + $0xa7]]
          %v1040 = vstv %s1039
          %v1041 = vmul.f32 %v1040, %v966
          %v1042 = vmul.f32 %v1040, %v967
          %v1043 = vadd.f32 %v1037, %v1041
          %v1044 = vadd.f32 %v1038, %v1042
          %1047 = vrot.lane.b32.xlu0 %v1043, 124
          %v1048 = vpop.permute.xlu0 %1047
          %1049 = vrot.lane.b32.xlu0 %v1044, 124
          %v1050 = vpop.permute.xlu0 %1049
          %v1053 = vadd.f32 %v1033, %v1048
          %v1054 = vadd.f32 %v1034, %v1050
          %s1055 = sld [smem:[#allocation10 + $0x28]]
          %v1056 = vstv %s1055
          %v1057 = vmul.f32 %v1056, %v960
          %v1058 = vmul.f32 %v1056, %v961
          %s1059 = sld [smem:[#allocation10 + $0xa8]]
          %v1060 = vstv %s1059
          %v1061 = vmul.f32 %v1060, %v966
          %v1062 = vmul.f32 %v1060, %v967
          %v1063 = vadd.f32 %v1057, %v1061
          %v1064 = vadd.f32 %v1058, %v1062
          %1067 = vrot.lane.b32.xlu0 %v1063, 123
          %v1068 = vpop.permute.xlu0 %1067
          %1069 = vrot.lane.b32.xlu0 %v1064, 123
          %v1070 = vpop.permute.xlu0 %1069
          %v1073 = vadd.f32 %v1053, %v1068
          %v1074 = vadd.f32 %v1054, %v1070
          %s1075 = sld [smem:[#allocation10 + $0x29]]
          %v1076 = vstv %s1075
          %v1077 = vmul.f32 %v1076, %v960
          %v1078 = vmul.f32 %v1076, %v961
          %s1079 = sld [smem:[#allocation10 + $0xa9]]
          %v1080 = vstv %s1079
          %v1081 = vmul.f32 %v1080, %v966
          %v1082 = vmul.f32 %v1080, %v967
          %v1083 = vadd.f32 %v1077, %v1081
          %v1084 = vadd.f32 %v1078, %v1082
          %1087 = vrot.lane.b32.xlu0 %v1083, 122
          %v1088 = vpop.permute.xlu0 %1087
          %1089 = vrot.lane.b32.xlu0 %v1084, 122
          %v1090 = vpop.permute.xlu0 %1089
          %v1093 = vadd.f32 %v1073, %v1088
          %v1094 = vadd.f32 %v1074, %v1090
          %s1095 = sld [smem:[#allocation10 + $0x2a]]
          %v1096 = vld [vmem:[#allocation4 + $0x6] sm:$0xff]
          %v1097 = vld [vmem:[#allocation4 + $0xe] sm:$0xff]
          %v1098 = vstv %s1095
          %v1099 = vmul.f32 %v1098, %v1096
          %v1100 = vmul.f32 %v1098, %v1097
          %s1101 = sld [smem:[#allocation10 + $0xaa]]
          %v1102 = vld [vmem:[#allocation5 + $0x6] sm:$0xff]
          %v1103 = vld [vmem:[#allocation5 + $0xe] sm:$0xff]
          %v1104 = vstv %s1101
          %v1105 = vmul.f32 %v1104, %v1102
          %v1106 = vmul.f32 %v1104, %v1103
          %v1107 = vadd.f32 %v1099, %v1105
          %v1108 = vadd.f32 %v1100, %v1106
          %v1109 = vadd.f32 %v1093, %v1107
          %v1110 = vadd.f32 %v1094, %v1108
          %s1111 = sld [smem:[#allocation10 + $0x2b]]
          %v1112 = vstv %s1111
          %v1113 = vmul.f32 %v1112, %v1096
          %v1114 = vmul.f32 %v1112, %v1097
          %s1115 = sld [smem:[#allocation10 + $0xab]]
          %v1116 = vstv %s1115
          %v1117 = vmul.f32 %v1116, %v1102
          %v1118 = vmul.f32 %v1116, %v1103
          %v1119 = vadd.f32 %v1113, %v1117
          %v1120 = vadd.f32 %v1114, %v1118
          %1123 = vrot.lane.b32.xlu0 %v1119, 127
          %v1124 = vpop.permute.xlu0 %1123
          %1125 = vrot.lane.b32.xlu0 %v1120, 127
          %v1126 = vpop.permute.xlu0 %1125
          %v1129 = vadd.f32 %v1109, %v1124
          %v1130 = vadd.f32 %v1110, %v1126
          %s1131 = sld [smem:[#allocation10 + $0x2c]]
          %v1132 = vstv %s1131
          %v1133 = vmul.f32 %v1132, %v1096
          %v1134 = vmul.f32 %v1132, %v1097
          %s1135 = sld [smem:[#allocation10 + $0xac]]
          %v1136 = vstv %s1135
          %v1137 = vmul.f32 %v1136, %v1102
          %v1138 = vmul.f32 %v1136, %v1103
          %v1139 = vadd.f32 %v1133, %v1137
          %v1140 = vadd.f32 %v1134, %v1138
          %1143 = vrot.lane.b32.xlu0 %v1139, 126
          %v1144 = vpop.permute.xlu0 %1143
          %1145 = vrot.lane.b32.xlu0 %v1140, 126
          %v1146 = vpop.permute.xlu0 %1145
          %v1149 = vadd.f32 %v1129, %v1144
          %v1150 = vadd.f32 %v1130, %v1146
          %s1151 = sld [smem:[#allocation10 + $0x2d]]
          %v1152 = vstv %s1151
          %v1153 = vmul.f32 %v1152, %v1096
          %v1154 = vmul.f32 %v1152, %v1097
          %s1155 = sld [smem:[#allocation10 + $0xad]]
          %v1156 = vstv %s1155
          %v1157 = vmul.f32 %v1156, %v1102
          %v1158 = vmul.f32 %v1156, %v1103
          %v1159 = vadd.f32 %v1153, %v1157
          %v1160 = vadd.f32 %v1154, %v1158
          %1163 = vrot.lane.b32.xlu0 %v1159, 125
          %v1164 = vpop.permute.xlu0 %1163
          %1165 = vrot.lane.b32.xlu0 %v1160, 125
          %v1166 = vpop.permute.xlu0 %1165
          %v1169 = vadd.f32 %v1149, %v1164
          %v1170 = vadd.f32 %v1150, %v1166
          %s1171 = sld [smem:[#allocation10 + $0x2e]]
          %v1172 = vstv %s1171
          %v1173 = vmul.f32 %v1172, %v1096
          %v1174 = vmul.f32 %v1172, %v1097
          %s1175 = sld [smem:[#allocation10 + $0xae]]
          %v1176 = vstv %s1175
          %v1177 = vmul.f32 %v1176, %v1102
          %v1178 = vmul.f32 %v1176, %v1103
          %v1179 = vadd.f32 %v1173, %v1177
          %v1180 = vadd.f32 %v1174, %v1178
          %1183 = vrot.lane.b32.xlu0 %v1179, 124
          %v1184 = vpop.permute.xlu0 %1183
          %1185 = vrot.lane.b32.xlu0 %v1180, 124
          %v1186 = vpop.permute.xlu0 %1185
          %v1189 = vadd.f32 %v1169, %v1184
          %v1190 = vadd.f32 %v1170, %v1186
          %s1191 = sld [smem:[#allocation10 + $0x2f]]
          %v1192 = vstv %s1191
          %v1193 = vmul.f32 %v1192, %v1096
          %v1194 = vmul.f32 %v1192, %v1097
          %s1195 = sld [smem:[#allocation10 + $0xaf]]
          %v1196 = vstv %s1195
          %v1197 = vmul.f32 %v1196, %v1102
          %v1198 = vmul.f32 %v1196, %v1103
          %v1199 = vadd.f32 %v1193, %v1197
          %v1200 = vadd.f32 %v1194, %v1198
          %1203 = vrot.lane.b32.xlu0 %v1199, 123
          %v1204 = vpop.permute.xlu0 %1203
          %1205 = vrot.lane.b32.xlu0 %v1200, 123
          %v1206 = vpop.permute.xlu0 %1205
          %v1209 = vadd.f32 %v1189, %v1204
          %v1210 = vadd.f32 %v1190, %v1206
          %s1211 = sld [smem:[#allocation10 + $0x30]]
          %v1212 = vstv %s1211
          %v1213 = vmul.f32 %v1212, %v1096
          %v1214 = vmul.f32 %v1212, %v1097
          %s1215 = sld [smem:[#allocation10 + $0xb0]]
          %v1216 = vstv %s1215
          %v1217 = vmul.f32 %v1216, %v1102
          %v1218 = vmul.f32 %v1216, %v1103
          %v1219 = vadd.f32 %v1213, %v1217
          %v1220 = vadd.f32 %v1214, %v1218
          %1223 = vrot.lane.b32.xlu0 %v1219, 122
          %v1224 = vpop.permute.xlu0 %1223
          %1225 = vrot.lane.b32.xlu0 %v1220, 122
          %v1226 = vpop.permute.xlu0 %1225
          %v1229 = vadd.f32 %v1209, %v1224
          %v1230 = vadd.f32 %v1210, %v1226
          %v1231 = vxor.u32 %v1229, 2147483648
          %v1232 = vxor.u32 %v1230, 2147483648
          %v1233 = vmul.f32 %v1231, 1.442695
          %v1234 = vpow.pop %v1233
          %v1235 = vmul.f32 %v1232, 1.442695
          %v1236 = vpow.pop %v1235
          %v1237 = vadd.f32 %v1234, 1.0
          %v1238 = vadd.f32 %v1236, 1.0
          %v1239 = vrcp.pop %v1237
          %v1240 = vmul.f32 1.0, %v1239
          %v1241 = vrcp.pop %v1238
          %v1242 = vmul.f32 1.0, %v1241
          %1243 = vst.msk [vmem:[%s192] sm:$0xff] %vm232, %v1240
          %1244 = vst.msk [vmem:[%s192 + $0x8] sm:$0xff] %vm232, %v1242
        $region44: #{spatial_attention.1} parent=27 // pred_fallthru
          _
        %s1245 = sand.u32 %s89, 1
        %s1246 = scalar_lea.sflag [#allocation8], %s1245
        %s1247 = sand.u32 %s89, 1
        %s1248 = smul.addr %s1247, 16
        %s1249 = scalar_lea.vmem [#allocation11], %s1248
        // Predicated region
        $region45: #{spatial_attention.1} parent=27 // pred_check
          %p1250 = pneg %p99
        $region46: #{spatial_attention.1} parent=27 // pred_check_branch
          %1252 = sbr.rel (%p1250) target = $region48
        $region47: #{spatial_attention.1} parent=27 // pred_region
          %s1254 = ssub.s32 256, 256
          %1255 = vsyncadd %s1246, %s1254
          %s1256 = smul.addr %s24, 2
          %s1257 = smul.addr %s1256, 128
          %s1258 = scalar_lea.hbm %s2, %s1257
          %s1259 = sshll.u32 %s1249, 4
          %s1260 = int_to_ptr.vmem [resolvable:$true] %s1259
          %1265 = dma.vmem_to_hbm [thread:$0]  %s1260, 256, %s1258, %s1246, 128, 128, 8
        $region48: #{spatial_attention.1} parent=27 // pred_fallthru
          _
      $region28: #{spatial_attention.1} parent=5 // pred_fallthru
        _
      %p1266 = scmp.le.s32.totalorder 2, %s15
      // Predicated region
      $region49: #{spatial_attention.1} parent=5 // pred_check
        %p1267 = pneg %p1266
      $region50: #{spatial_attention.1} parent=5 // pred_check_branch
        %1269 = sbr.rel (%p1267) target = $region52
      $region51: #{spatial_attention.1} parent=5 // pred_region
        %s1270 = ssub.s32 %s15, 2
        // Predicated region
        $region53: #{spatial_attention.1} parent=51 // pred_check
          %p1271 = pneg %p105
        $region54: #{spatial_attention.1} parent=51 // pred_check_branch
          %1273 = sbr.rel (%p1271) target = $region56
        $region55: #{spatial_attention.1} parent=51 // pred_region
          %s1274 = sand.u32 %s90, 1
          %s1275 = scalar_lea.sflag [#allocation8], %s1274
          %s1276 = sand.u32 %s90, 1
          %s1277 = smul.addr %s1276, 16
          %s1278 = scalar_lea.vmem [#allocation11], %s1277
          %1279 = dma.done %s1275, 256
        $region56: #{spatial_attention.1} parent=51 // pred_fallthru
          _
      $region52: #{spatial_attention.1} parent=5 // pred_fallthru
        _
    $region6: #{spatial_attention.1} parent=1 // loop_footer
      %s19 = sadd.s32 1, %s15
    $region7: #{spatial_attention.1} parent=1 // loop_footer_branch
      %14 = sbr.rel target = $region3
    $region8: #{spatial_attention.1} parent=1 // loop_exit
      _
    %1280 = vsyncpa [#allocation7], 1
    %s1281 = scalar_lea.sflag [#allocation7], 1
    %1282 = vsyncpa %s1281, 1
    %1283 = vsyncpa [#allocation8], 1
    %s1284 = scalar_lea.sflag [#allocation8], 1
    %1285 = vsyncpa %s1284, 1
    %1286 = vsyncpa [#allocation9], 1
    %s1287 = scalar_lea.sflag [#allocation9], 1
    %1288 = vsyncpa %s1287, 1

</llo_original>
